<compile_context>
chip_gen: v6e
topology: v6e:2x2x1
jax: 0.10.0
libtpu: 0.0.40
codegen_flags: <defaults>
</compile_context>

<pallas_src>
import functools

import jax
import jax.numpy as jnp
from jax import lax
from jax.experimental import pallas as pl
from jax.experimental.pallas import tpu as pltpu


def _idiv(x, d):
    # x // d for int32 iotas; use a shift when d is a power of two (pure VPU bit op).
    if d & (d - 1) == 0:
        return jnp.right_shift(x, int(d).bit_length() - 1)
    return x // d


def _imod(x, d):
    # x % d for int32 iotas; use an AND when d is a power of two (pure VPU bit op).
    if d & (d - 1) == 0:
        return jnp.bitwise_and(x, d - 1)
    return x % d


def _digit_caps_kernel(x_ref, w_ref, v_ref, *, num_capsules, channels_in,
                       channels_out, capsules_dim, num_routing):
    n_in, c_in = num_capsules, channels_in
    c_out, d_caps = channels_out, capsules_dim
    bn = x_ref.shape[0]            # B*N rows, b-major (row r -> b = r // N, n = r % N)
    bsz = bn // n_in
    kdim = n_in * c_in             # contraction depth of the fused transform matmul
    m = d_caps * c_out             # output columns, d-major (col = d*Cout + co)
    f32 = jnp.float32

    x = x_ref[...]                 # (B*N, Cin)   bf16
    w = w_ref[...]                 # (N*Cin, M)   bf16

    # ---- Per-capsule transform as ONE block-diagonal MXU matmul -------------------
    # 1) replicate x's Cin columns across all N column groups with a tiny 0/1 "expand"
    #    matmul (MXU) instead of lane tiling,
    # 2) zero the off-diagonal blocks with a row/column capsule-id mask (VPU),
    # 3) one (B*N, N*Cin) @ (N*Cin, M) matmul -> u already in the flat b-major 2-D
    #    layout the routing loop wants (no per-iteration relayouts).
    exp_r = lax.broadcasted_iota(jnp.int32, (c_in, kdim), 0)
    exp_c = _imod(lax.broadcasted_iota(jnp.int32, (c_in, kdim), 1), c_in)
    expand = jnp.where(exp_r == exp_c, 1.0, 0.0).astype(x.dtype)          # (Cin, N*Cin)
    x_rep = jnp.dot(x, expand, preferred_element_type=f32)                # (B*N, N*Cin)

    row_n = _imod(lax.broadcasted_iota(jnp.int32, (bn, kdim), 0), n_in)   # r % N
    col_n = _idiv(lax.broadcasted_iota(jnp.int32, (bn, kdim), 1), c_in)   # k // Cin
    blkmask = jnp.where(row_n == col_n, 1.0, 0.0)                         # (B*N, N*Cin)
    x_bd = (x_rep * blkmask).astype(x.dtype)                              # block-diagonal

    # u[b*N+n, d*Cout+co] = sum_ci x[b,n,ci] * dc_w[d,n,ci,co]
    u = jnp.dot(x_bd, w, preferred_element_type=f32)                      # (B*N, M) f32
    u3 = u.reshape(bsz, n_in, m)     # tile-preserving view (N is a multiple of 8)

    # E[d, col] = 1 iff column col belongs to output capsule d (built in-kernel; no DMA).
    e_r = lax.broadcasted_iota(jnp.int32, (d_caps, m), 0)
    e_c = _idiv(lax.broadcasted_iota(jnp.int32, (d_caps, m), 1), c_out)
    e = jnp.where(e_r == e_c, 1.0, 0.0)                                   # (D, M) f32

    def squash(s):
        # reference coeff = s^2/((1+s^2)*sqrt(s^2)) == |s|/(1+s^2); finite at s == 0.
        return (jnp.abs(s) * pl.reciprocal(1.0 + s * s, approx=True)) * s

    # ---- Routing.  Iteration 0 peeled: softmax of all-zero logits is uniform. -----
    s = jnp.sum(u3, axis=1, keepdims=True) * (1.0 / n_in)                 # (B, 1, M)
    v = squash(s)
    blog = None                                                           # (B*N, D) logits
    for _ in range(1, num_routing):                                       # static unroll
        # agreement a[r, d] = sum_co u[r, d*Cout+co] * v[b(r), d*Cout+co]   (MXU, trans_b)
        uv = (u3 * v).reshape(bn, m)        # sublane broadcast of v, free merge
        a = lax.dot_general(uv, e, (((1,), (1,)), ((), ())),
                            preferred_element_type=f32)                   # (B*N, D)
        blog = a if blog is None else blog + a
        # softmax over the input-capsule axis n: contiguous 32-sublane reduce per b.
        b3 = blog.reshape(bsz, n_in, d_caps)
        b3 = b3 - jnp.max(b3, axis=1, keepdims=True)
        eb = jnp.exp(b3)
        c3 = eb / jnp.sum(eb, axis=1, keepdims=True)                      # (B, N, D)
        # broadcast c over each capsule's Cout columns (MXU), then reduce over n.
        c_full = jnp.dot(c3.reshape(bn, d_caps), e,
                         preferred_element_type=f32).reshape(bsz, n_in, m)
        s = jnp.sum(c_full * u3, axis=1, keepdims=True)                   # (B, 1, M)
        v = squash(s)

    v_ref[...] = v                                                        # (B, 1, M)


@functools.partial(jax.jit, static_argnames=('num_routing',))
def digit_capsules_forward(x, dc_w, *, num_routing):
    """x: (B, N, Cin);  dc_w: (D, N, Cin, Cout)  ->  v: (D, B, 1, 1, Cout)."""
    d_caps, n_in, c_in, c_out = dc_w.shape
    bsz = x.shape[0]
    m = d_caps * c_out

    # Trace-time layout glue (tiny, bf16 for the MXU): flat b-major input rows and a
    # (N*Cin, D*Cout) weight with d-major columns.
    xr = x.reshape(bsz * n_in, c_in).astype(jnp.bfloat16)                 # (B*N, Cin)
    wr = jnp.transpose(dc_w, (1, 2, 0, 3)).reshape(n_in * c_in, m)        # (N*Cin, M)
    wr = wr.astype(jnp.bfloat16)

    kern = functools.partial(
        _digit_caps_kernel, num_capsules=n_in, channels_in=c_in,
        channels_out=c_out, capsules_dim=d_caps, num_routing=num_routing)
    v = pl.pallas_call(
        kern,
        out_shape=jax.ShapeDtypeStruct((bsz, 1, m), jnp.float32),
        grid_spec=pltpu.PrefetchScalarGridSpec(
            num_scalar_prefetch=0,
            # Single grid step: everything (incl. double buffers) is well under 1 MiB of
            # VMEM on any TPU generation; extra steps would only add per-step overhead.
            # For large B on v7x, add a leading "parallel" grid axis over the batch.
            grid=(1,),
            in_specs=[
                pl.BlockSpec((bsz * n_in, c_in), lambda i: (0, 0)),
                pl.BlockSpec((n_in * c_in, m), lambda i: (0, 0)),
            ],
            out_specs=pl.BlockSpec((bsz, 1, m), lambda i: (0, 0, 0)),
        ),
        compiler_params=pltpu.CompilerParams(
            dimension_semantics=("arbitrary",)),
    )(xr, wr)

    # (B, 1, D*Cout) d-major  ->  PyTorch output layout (D, B, 1, 1, Cout); ~1 KB.
    out = jnp.transpose(v.reshape(bsz, d_caps, c_out), (1, 0, 2))
    return out.reshape(d_caps, bsz, 1, 1, c_out)


def _reference(x, dc_w, num_routing):
    # Pure-JAX mirror of the PyTorch module (including its elementwise "squash").
    u = jnp.einsum('bnc,dnco->dbno', x, dc_w)[:, :, :, None, :]           # (D,B,N,1,Cout)
    b = jnp.zeros_like(u)
    v = None
    for i in range(num_routing):
        c = jax.nn.softmax(b, axis=2)
        s = jnp.sum(c * u, axis=2, keepdims=True)                         # (D,B,1,1,Cout)
        vec_norm = jnp.sum(s * s, axis=2, keepdims=True)                  # singleton axis
        coeff = vec_norm / ((1.0 + vec_norm) * jnp.sqrt(vec_norm))
        v = coeff * s
        if i != num_routing - 1:
            b = b + jnp.sum(u * v, axis=-1, keepdims=True)
    return v


if __name__ == "__main__":
    # DigitCapsules(channels_in=8, channels_out=16, capsules_dim=10,
    #               num_routing=3, num_capsules=32);  x: (B, num_capsules, channels_in)
    B, N, Cin, Cout, D, num_routing = 2, 32, 8, 16, 10, 3

    key = jax.random.PRNGKey(0)
    kw, kx = jax.random.split(key)
    dc_w = jax.random.normal(kw, (D, N, Cin, Cout), dtype=jnp.float32)    # torch.randn init
    # Input capsules (outputs of an upstream squash have sub-unit components).
    x = 0.5 * jax.random.normal(kx, (B, N, Cin), dtype=jnp.float32)

    out = jax.block_until_ready(
        digit_capsules_forward(x, dc_w, num_routing=num_routing))
    ref = jax.block_until_ready(_reference(x, dc_w, num_routing))

    assert out.shape == ref.shape == (D, B, 1, 1, Cout), (out.shape, ref.shape)
    max_err = float(jnp.max(jnp.abs(out - ref)))
    assert jnp.allclose(out, ref, atol=5e-2, rtol=5e-2), max_err
    print("KERNEL_OK")
</pallas_src>

<mosaic_0001>
module attributes {stable_mosaic.version = 11 : i64} {
  func.func @_digit_caps_kernel(%arg0: i32, %arg1: memref<64x8xbf16, #tpu.memory_space<vmem>>, %arg2: memref<256x160xbf16, #tpu.memory_space<vmem>>, %arg3: memref<2x1x160xf32, #tpu.memory_space<vmem>>) attributes {dimension_semantics = [#tpu.dimension_semantics<arbitrary>], iteration_bounds = array<i64: 1>, scalar_prefetch = 0 : i64, scratch_operands = 0 : i64, tpu.core_type = #tpu.core_type<tc>, window_params = [{pipeline_mode = #tpu.pipeline_mode<synchronous>, transform_indices = @transform_0, window_bounds = array<i64: 64, 8>}, {pipeline_mode = #tpu.pipeline_mode<synchronous>, transform_indices = @transform_1, window_bounds = array<i64: 256, 160>}, {pipeline_mode = #tpu.pipeline_mode<synchronous>, transform_indices = @transform_2, window_bounds = array<i64: 2, 1, 160>}]} {
    %c0 = arith.constant 0 : index
    %c0_0 = arith.constant 0 : index
    %0 = vector.load %arg1[%c0, %c0_0] : memref<64x8xbf16, #tpu.memory_space<vmem>>, vector<64x8xbf16>
    %c0_1 = arith.constant 0 : index
    %c0_2 = arith.constant 0 : index
    %1 = vector.load %arg2[%c0_1, %c0_2] : memref<256x160xbf16, #tpu.memory_space<vmem>>, vector<256x160xbf16>
    %2 = tpu.iota {dimensions = array<i32: 0>} : vector<8x256xi32>
    %3 = tpu.iota {dimensions = array<i32: 1>} : vector<8x256xi32>
    %c7_i32 = arith.constant 7 : i32
    %4 = vector.broadcast %c7_i32 : i32 to vector<8x256xi32>
    %5 = arith.andi %3, %4 : vector<8x256xi32>
    %6 = arith.cmpi eq, %2, %5 : vector<8x256xi32>
    %cst = arith.constant 1.000000e+00 : f32
    %cst_3 = arith.constant 0.000000e+00 : f32
    %7 = vector.broadcast %cst : f32 to vector<8x256xf32>
    %8 = vector.broadcast %cst_3 : f32 to vector<8x256xf32>
    %9 = arith.select %6, %7, %8 : vector<8x256xi1>, vector<8x256xf32>
    %10 = arith.truncf %9 : vector<8x256xf32> to vector<8x256xbf16>
    %cst_4 = arith.constant dense<0.000000e+00> : vector<64x256xf32>
    %11 = tpu.matmul %0, %10, %cst_4 {dimension_numbers = #tpu.dot_dimension_numbers<[1], [0], [0], [1], [0, 0, 1, 1], [], []>} : vector<64x8xbf16>, vector<8x256xbf16>, vector<64x256xf32> -> vector<64x256xf32>
    %12 = tpu.iota {dimensions = array<i32: 0>} : vector<64x256xi32>
    %c31_i32 = arith.constant 31 : i32
    %13 = vector.broadcast %c31_i32 : i32 to vector<64x256xi32>
    %14 = arith.andi %12, %13 : vector<64x256xi32>
    %15 = tpu.iota {dimensions = array<i32: 1>} : vector<64x256xi32>
    %c3_i32 = arith.constant 3 : i32
    %16 = vector.broadcast %c3_i32 : i32 to vector<64x256xi32>
    %17 = arith.shrsi %15, %16 : vector<64x256xi32>
    %18 = arith.cmpi eq, %14, %17 : vector<64x256xi32>
    %cst_5 = arith.constant 1.000000e+00 : f32
    %cst_6 = arith.constant 0.000000e+00 : f32
    %19 = vector.broadcast %cst_5 : f32 to vector<64x256xf32>
    %20 = vector.broadcast %cst_6 : f32 to vector<64x256xf32>
    %21 = arith.select %18, %19, %20 : vector<64x256xi1>, vector<64x256xf32>
    %22 = arith.mulf %11, %21 : vector<64x256xf32>
    %23 = arith.truncf %22 : vector<64x256xf32> to vector<64x256xbf16>
    %cst_7 = arith.constant dense<0.000000e+00> : vector<64x160xf32>
    %24 = tpu.matmul %23, %1, %cst_7 {dimension_numbers = #tpu.dot_dimension_numbers<[1], [0], [0], [1], [0, 0, 1, 1], [], []>} : vector<64x256xbf16>, vector<256x160xbf16>, vector<64x160xf32> -> vector<64x160xf32>
    %25 = vector.shape_cast %24 : vector<64x160xf32> to vector<2x32x160xf32>
    %26 = tpu.iota {dimensions = array<i32: 0>} : vector<10x160xi32>
    %27 = tpu.iota {dimensions = array<i32: 1>} : vector<10x160xi32>
    %c4_i32 = arith.constant 4 : i32
    %28 = vector.broadcast %c4_i32 : i32 to vector<10x160xi32>
    %29 = arith.shrsi %27, %28 : vector<10x160xi32>
    %30 = arith.cmpi eq, %26, %29 : vector<10x160xi32>
    %cst_8 = arith.constant 1.000000e+00 : f32
    %cst_9 = arith.constant 0.000000e+00 : f32
    %31 = vector.broadcast %cst_8 : f32 to vector<10x160xf32>
    %32 = vector.broadcast %cst_9 : f32 to vector<10x160xf32>
    %33 = arith.select %30, %31, %32 : vector<10x160xi1>, vector<10x160xf32>
    %cst_10 = arith.constant dense<0.000000e+00> : vector<2x160xf32>
    %34 = vector.multi_reduction <add>, %25, %cst_10 [1] : vector<2x32x160xf32> to vector<2x160xf32>
    %35 = vector.shape_cast %34 : vector<2x160xf32> to vector<2x1x160xf32>
    %cst_11 = arith.constant 3.125000e-02 : f32
    %36 = vector.broadcast %cst_11 : f32 to vector<2x1x160xf32>
    %37 = arith.mulf %35, %36 : vector<2x1x160xf32>
    %38 = math.absf %37 : vector<2x1x160xf32>
    %39 = arith.mulf %37, %37 : vector<2x1x160xf32>
    %cst_12 = arith.constant 1.000000e+00 : f32
    %40 = vector.broadcast %cst_12 : f32 to vector<2x1x160xf32>
    %41 = arith.addf %40, %39 : vector<2x1x160xf32>
    %42 = tpu.reciprocal %41 {approx = true} : vector<2x1x160xf32> -> vector<2x1x160xf32>
    %43 = arith.mulf %38, %42 : vector<2x1x160xf32>
    %44 = arith.mulf %43, %37 : vector<2x1x160xf32>
    %45 = vector.broadcast %44 : vector<2x1x160xf32> to vector<2x32x160xf32>
    %46 = arith.mulf %25, %45 : vector<2x32x160xf32>
    %47 = vector.shape_cast %46 : vector<2x32x160xf32> to vector<64x160xf32>
    %cst_13 = arith.constant dense<0.000000e+00> : vector<64x10xf32>
    %48 = tpu.matmul %47, %33, %cst_13 {dimension_numbers = #tpu.dot_dimension_numbers<[1], [1], [0], [0], [0, 0, 1, 0], [], []>} : vector<64x160xf32>, vector<10x160xf32>, vector<64x10xf32> -> vector<64x10xf32>
    %49 = vector.shape_cast %48 : vector<64x10xf32> to vector<2x32x10xf32>
    %cst_14 = arith.constant dense<0xFF800000> : vector<2x10xf32>
    %50 = vector.multi_reduction <maximumf>, %49, %cst_14 [1] : vector<2x32x10xf32> to vector<2x10xf32>
    %51 = vector.shape_cast %50 : vector<2x10xf32> to vector<2x1x10xf32>
    %52 = vector.broadcast %51 : vector<2x1x10xf32> to vector<2x32x10xf32>
    %53 = arith.subf %49, %52 : vector<2x32x10xf32>
    %54 = math.exp %53 : vector<2x32x10xf32>
    %cst_15 = arith.constant dense<0.000000e+00> : vector<2x10xf32>
    %55 = vector.multi_reduction <add>, %54, %cst_15 [1] : vector<2x32x10xf32> to vector<2x10xf32>
    %56 = vector.shape_cast %55 : vector<2x10xf32> to vector<2x1x10xf32>
    %57 = vector.broadcast %56 : vector<2x1x10xf32> to vector<2x32x10xf32>
    %58 = arith.divf %54, %57 : vector<2x32x10xf32>
    %59 = vector.shape_cast %58 : vector<2x32x10xf32> to vector<64x10xf32>
    %cst_16 = arith.constant dense<0.000000e+00> : vector<64x160xf32>
    %60 = tpu.matmul %59, %33, %cst_16 {dimension_numbers = #tpu.dot_dimension_numbers<[1], [0], [0], [1], [0, 0, 1, 1], [], []>} : vector<64x10xf32>, vector<10x160xf32>, vector<64x160xf32> -> vector<64x160xf32>
    %61 = vector.shape_cast %60 : vector<64x160xf32> to vector<2x32x160xf32>
    %62 = arith.mulf %61, %25 : vector<2x32x160xf32>
    %cst_17 = arith.constant dense<0.000000e+00> : vector<2x160xf32>
    %63 = vector.multi_reduction <add>, %62, %cst_17 [1] : vector<2x32x160xf32> to vector<2x160xf32>
    %64 = vector.shape_cast %63 : vector<2x160xf32> to vector<2x1x160xf32>
    %65 = math.absf %64 : vector<2x1x160xf32>
    %66 = arith.mulf %64, %64 : vector<2x1x160xf32>
    %cst_18 = arith.constant 1.000000e+00 : f32
    %67 = vector.broadcast %cst_18 : f32 to vector<2x1x160xf32>
    %68 = arith.addf %67, %66 : vector<2x1x160xf32>
    %69 = tpu.reciprocal %68 {approx = true} : vector<2x1x160xf32> -> vector<2x1x160xf32>
    %70 = arith.mulf %65, %69 : vector<2x1x160xf32>
    %71 = arith.mulf %70, %64 : vector<2x1x160xf32>
    %72 = vector.broadcast %71 : vector<2x1x160xf32> to vector<2x32x160xf32>
    %73 = arith.mulf %25, %72 : vector<2x32x160xf32>
    %74 = vector.shape_cast %73 : vector<2x32x160xf32> to vector<64x160xf32>
    %cst_19 = arith.constant dense<0.000000e+00> : vector<64x10xf32>
    %75 = tpu.matmul %74, %33, %cst_19 {dimension_numbers = #tpu.dot_dimension_numbers<[1], [1], [0], [0], [0, 0, 1, 0], [], []>} : vector<64x160xf32>, vector<10x160xf32>, vector<64x10xf32> -> vector<64x10xf32>
    %76 = arith.addf %48, %75 : vector<64x10xf32>
    %77 = vector.shape_cast %76 : vector<64x10xf32> to vector<2x32x10xf32>
    %cst_20 = arith.constant dense<0xFF800000> : vector<2x10xf32>
    %78 = vector.multi_reduction <maximumf>, %77, %cst_20 [1] : vector<2x32x10xf32> to vector<2x10xf32>
    %79 = vector.shape_cast %78 : vector<2x10xf32> to vector<2x1x10xf32>
    %80 = vector.broadcast %79 : vector<2x1x10xf32> to vector<2x32x10xf32>
    %81 = arith.subf %77, %80 : vector<2x32x10xf32>
    %82 = math.exp %81 : vector<2x32x10xf32>
    %cst_21 = arith.constant dense<0.000000e+00> : vector<2x10xf32>
    %83 = vector.multi_reduction <add>, %82, %cst_21 [1] : vector<2x32x10xf32> to vector<2x10xf32>
    %84 = vector.shape_cast %83 : vector<2x10xf32> to vector<2x1x10xf32>
    %85 = vector.broadcast %84 : vector<2x1x10xf32> to vector<2x32x10xf32>
    %86 = arith.divf %82, %85 : vector<2x32x10xf32>
    %87 = vector.shape_cast %86 : vector<2x32x10xf32> to vector<64x10xf32>
    %cst_22 = arith.constant dense<0.000000e+00> : vector<64x160xf32>
    %88 = tpu.matmul %87, %33, %cst_22 {dimension_numbers = #tpu.dot_dimension_numbers<[1], [0], [0], [1], [0, 0, 1, 1], [], []>} : vector<64x10xf32>, vector<10x160xf32>, vector<64x160xf32> -> vector<64x160xf32>
    %89 = vector.shape_cast %88 : vector<64x160xf32> to vector<2x32x160xf32>
    %90 = arith.mulf %89, %25 : vector<2x32x160xf32>
    %cst_23 = arith.constant dense<0.000000e+00> : vector<2x160xf32>
    %91 = vector.multi_reduction <add>, %90, %cst_23 [1] : vector<2x32x160xf32> to vector<2x160xf32>
    %92 = vector.shape_cast %91 : vector<2x160xf32> to vector<2x1x160xf32>
    %93 = math.absf %92 : vector<2x1x160xf32>
    %94 = arith.mulf %92, %92 : vector<2x1x160xf32>
    %cst_24 = arith.constant 1.000000e+00 : f32
    %95 = vector.broadcast %cst_24 : f32 to vector<2x1x160xf32>
    %96 = arith.addf %95, %94 : vector<2x1x160xf32>
    %97 = tpu.reciprocal %96 {approx = true} : vector<2x1x160xf32> -> vector<2x1x160xf32>
    %98 = arith.mulf %93, %97 : vector<2x1x160xf32>
    %99 = arith.mulf %98, %92 : vector<2x1x160xf32>
    %c0_25 = arith.constant 0 : index
    %c0_26 = arith.constant 0 : index
    %c0_27 = arith.constant 0 : index
    %100 = vector.load %arg3[%c0_25, %c0_26, %c0_27] : memref<2x1x160xf32, #tpu.memory_space<vmem>>, vector<2x1x160xf32>
    tpu.vector_store %arg3[%c0_25, %c0_26, %c0_27], %99 {strides = array<i32>} : memref<2x1x160xf32, #tpu.memory_space<vmem>>, vector<2x1x160xf32>,
    return
  }
  func.func @transform_0(%arg0: i32) -> (i32, i32) {
    %c0_i32 = arith.constant 0 : i32
    %c0_i32_0 = arith.constant 0 : i32
    %c0_i32_1 = arith.constant 0 : i32
    return %c0_i32, %c0_i32_0 : i32, i32
  }
  func.func @transform_1(%arg0: i32) -> (i32, i32) {
    %c0_i32 = arith.constant 0 : i32
    %c0_i32_0 = arith.constant 0 : i32
    %c0_i32_1 = arith.constant 0 : i32
    return %c0_i32, %c0_i32_0 : i32, i32
  }
  func.func @transform_2(%arg0: i32) -> (i32, i32, i32) {
    %c0_i32 = arith.constant 0 : i32
    %c0_i32_0 = arith.constant 0 : i32
    %c0_i32_1 = arith.constant 0 : i32
    %c0_i32_2 = arith.constant 0 : i32
    return %c0_i32, %c0_i32_0, %c0_i32_1 : i32, i32, i32
  }
}

</mosaic_0001>

<llo_original>
// kernel: digit_capsules_forward.1
$region0: #{digit_capsules_forward.1}
  #allocation0 [shape = 'u32[]', space=smem, size = 0x4, offset = 0x4, fixed_abs, tag = 'smem constant byte address 0x4 - core index']
  #allocation1 [shape = 'u32[144,128]{1,0:T(1,128)}', space=vmem, size = 0x12000, scoped, tag = 'internal scratch']
  %s0 = inlined_call_operand.vmem [shape: bf16[64,8], index: 0, kind: input, shape index: {}]
  %s1 = inlined_call_operand.vmem [shape: bf16[256,160], index: 1, kind: input, shape index: {}]
  %s2 = inlined_call_operand.vmem [shape: f32[2,1,160], index: 2, kind: output, shape index: {}]
  %s3 = sld [smem:[#allocation0]]
  $region18: #{digit_capsules_forward.1} parent=0
    _
  %s5 = ssub.s32 1, %s3
  %s6 = scalar_select 0, %s5, %s3
  // Predicated region
  $region2: #{digit_capsules_forward.1} parent=0 // pred_check
    _
  $region3: #{digit_capsules_forward.1} parent=0 // pred_check_branch
    %8 = sbr.rel (0) target = $region5
  $region4: #{digit_capsules_forward.1} parent=0 // pred_region
    _
  $region5: #{digit_capsules_forward.1} parent=0 // pred_fallthru
    _
  // Predicated region
  $region6: #{digit_capsules_forward.1} parent=0 // pred_check
    _
  $region7: #{digit_capsules_forward.1} parent=0 // pred_check_branch
    %10 = sbr.rel (0) target = $region9
  $region8: #{digit_capsules_forward.1} parent=0 // pred_region
    _
  $region9: #{digit_capsules_forward.1} parent=0 // pred_fallthru
    _
  %v12 = vld [vmem:[%s0] sm:$0xf]
  %v13 = vld [vmem:[%s0 + $0x4] sm:$0xf]
  %v14 = vld [vmem:[%s0 + $0x8] sm:$0xf]
  %v15 = vld [vmem:[%s0 + $0xc] sm:$0xf]
  %v16 = vld [vmem:[%s0 + $0x10] sm:$0xf]
  %v17 = vld [vmem:[%s0 + $0x14] sm:$0xf]
  %v18 = vld [vmem:[%s0 + $0x18] sm:$0xf]
  %v19 = vld [vmem:[%s0 + $0x1c] sm:$0xf]
  %v20 = vld [vmem:[%s1] sm:$0xff]
  %v21 = vld [vmem:[%s1 + $0x8] sm:$0xff]
  %v22 = vld [vmem:[%s1 + $0x10] sm:$0xff]
  %v23 = vld [vmem:[%s1 + $0x18] sm:$0xff]
  %v24 = vld [vmem:[%s1 + $0x20] sm:$0xff]
  %v25 = vld [vmem:[%s1 + $0x28] sm:$0xff]
  %v26 = vld [vmem:[%s1 + $0x30] sm:$0xff]
  %v27 = vld [vmem:[%s1 + $0x38] sm:$0xff]
  %v28 = vld [vmem:[%s1 + $0x40] sm:$0xff]
  %v29 = vld [vmem:[%s1 + $0x48] sm:$0xff]
  %v30 = vld [vmem:[%s1 + $0x50] sm:$0xff]
  %v31 = vld [vmem:[%s1 + $0x58] sm:$0xff]
  %v32 = vld [vmem:[%s1 + $0x60] sm:$0xff]
  %v33 = vld [vmem:[%s1 + $0x68] sm:$0xff]
  %v34 = vld [vmem:[%s1 + $0x70] sm:$0xff]
  %v35 = vld [vmem:[%s1 + $0x78] sm:$0xff]
  %v36 = vld [vmem:[%s1 + $0x80] sm:$0xff]
  %v37 = vld [vmem:[%s1 + $0x88] sm:$0xff]
  %v38 = vld [vmem:[%s1 + $0x90] sm:$0xff]
  %v39 = vld [vmem:[%s1 + $0x98] sm:$0xff]
  %v40 = vld [vmem:[%s1 + $0xa0] sm:$0xff]
  %v41 = vld [vmem:[%s1 + $0xa8] sm:$0xff]
  %v42 = vld [vmem:[%s1 + $0xb0] sm:$0xff]
  %v43 = vld [vmem:[%s1 + $0xb8] sm:$0xff]
  %v44 = vld [vmem:[%s1 + $0xc0] sm:$0xff]
  %v45 = vld [vmem:[%s1 + $0xc8] sm:$0xff]
  %v46 = vld [vmem:[%s1 + $0xd0] sm:$0xff]
  %v47 = vld [vmem:[%s1 + $0xd8] sm:$0xff]
  %v48 = vld [vmem:[%s1 + $0xe0] sm:$0xff]
  %v49 = vld [vmem:[%s1 + $0xe8] sm:$0xff]
  %v50 = vld [vmem:[%s1 + $0xf0] sm:$0xff]
  %v51 = vld [vmem:[%s1 + $0xf8] sm:$0xff]
  %v52 = vlaneseq
  %v53 = vshrl.u32 %v52, 7
  %v54 = vlaneseq
  %v55 = vand.u32 %v54, 127
  %v56 = vadd.s32 %v55, 128
  %v57 = vand.u32 %v55, 7
  %v58 = vand.u32 %v56, 7
  %vm59 = vcmp.eq.s32.totalorder %v53, %v57
  %vm60 = vcmp.eq.s32.totalorder %v53, %v58
  %v61 = vsel %vm59, 1.0, 0.0
  %v62 = vsel %vm60, 1.0, 0.0
  %v63 = vpack.c.bf16 %v61, %v61
  %v64 = vpack.c.bf16 %v62, %v62
  %v73 = vunpack.c.l.b16 %v12
  %v74 = vunpack.c.l.b16 %v13
  %v75 = vunpack.c.l.b16 %v14
  %v76 = vunpack.c.l.b16 %v15
  %v77 = vunpack.c.l.b16 %v16
  %v78 = vunpack.c.l.b16 %v17
  %v79 = vunpack.c.l.b16 %v18
  %v80 = vunpack.c.l.b16 %v19
  %v81 = vpack.c.b16 %v74, %v73
  %v82 = vpack.c.b16 %v76, %v75
  %v83 = vpack.c.b16 %v78, %v77
  %v84 = vpack.c.b16 %v80, %v79
  %vm85 = vcmask 64512
  %v87 = vsel %vm85, %v81, 0
  %v90 = vsel %vm85, %v82, 0
  %v93 = vsel %vm85, %v83, 0
  %v96 = vsel %vm85, %v84, 0
  %vm98 = vcmask 1043456
  %v100 = vsel %vm98, %v63, 0
  %v103 = vsel %vm98, %v64, 0
  %105 = vmatprep.subr.bf16.mxu0 0
  %106 = vmatpush1.bf16.msra.mxu0 0
  %107 = vmatprep.subr.bf16.mxu0 0
  %108 = vmatpush1.bf16.msra.mxu0 0
  %109 = vmatprep.subr.bf16.mxu0 0
  %110 = vmatpush1.bf16.msra.mxu0 0
  %111 = vmatprep.subr.bf16.mxu0 0
  %112 = vmatpush1.bf16.msra.mxu0 0
  %113 = vmatprep.subr.bf16.mxu0 0
  %114 = vmatpush1.bf16.msra.mxu0 0
  %115 = vmatprep.subr.bf16.mxu0 0
  %116 = vmatpush1.bf16.msra.mxu0 0
  %117 = vmatprep.subr.bf16.mxu0 0
  %118 = vmatpush1.bf16.msra.mxu0 0
  %119 = vmatprep.subr.bf16.mxu0 %v103
  %120 = vmatpush1.bf16.msra.mxu0 %v100
  %121 = vmatprep.subr.bf16.mxu0 0
  %122 = vmatpush2.bf16.msra.mxu0 0
  %123 = vmatprep.subr.bf16.mxu0 0
  %124 = vmatpush2.bf16.msra.mxu0 0
  %125 = vmatprep.subr.bf16.mxu0 0
  %126 = vmatpush2.bf16.msra.mxu0 0
  %127 = vmatprep.subr.bf16.mxu0 0
  %128 = vmatpush2.bf16.msra.mxu0 0
  %129 = vmatprep.subr.bf16.mxu0 0
  %130 = vmatpush2.bf16.msra.mxu0 0
  %131 = vmatprep.subr.bf16.mxu0 0
  %132 = vmatpush2.bf16.msra.mxu0 0
  %133 = vmatprep.subr.bf16.mxu0 0
  %134 = vmatpush2.bf16.msra.mxu0 0
  %135 = vmatprep.subr.bf16.mxu0 0
  %136 = vmatpush2.bf16.msra.mxu0 0
  %137 = vmatprep.mubr.bf16.mxu0 0
  %138 = vmatmul.mubr.bf16.gmra.mxu0 %v87
  %v139 = vpop.f32.mrf.mxu0
  %v140 = vadd.f32 0.0, %v139
  %v141 = vpop.f32.mrf.mxu0
  %v142 = vadd.f32 0.0, %v141
  %v143 = vpop.f32.mrf.mxu0
  %v144 = vadd.f32 0.0, %v143
  %v145 = vpop.f32.mrf.mxu0
  %v146 = vadd.f32 0.0, %v145
  %147 = vmatprep.mubr.bf16.mxu0 0
  %148 = vmatmul.mubr.bf16.gmra.mxu0 %v90
  %v149 = vpop.f32.mrf.mxu0
  %v150 = vadd.f32 0.0, %v149
  %v151 = vpop.f32.mrf.mxu0
  %v152 = vadd.f32 0.0, %v151
  %v153 = vpop.f32.mrf.mxu0
  %v154 = vadd.f32 0.0, %v153
  %v155 = vpop.f32.mrf.mxu0
  %v156 = vadd.f32 0.0, %v155
  %157 = vmatprep.mubr.bf16.mxu0 0
  %158 = vmatmul.mubr.bf16.gmra.mxu0 %v93
  %v159 = vpop.f32.mrf.mxu0
  %v160 = vadd.f32 0.0, %v159
  %v161 = vpop.f32.mrf.mxu0
  %v162 = vadd.f32 0.0, %v161
  %v163 = vpop.f32.mrf.mxu0
  %v164 = vadd.f32 0.0, %v163
  %v165 = vpop.f32.mrf.mxu0
  %v166 = vadd.f32 0.0, %v165
  %167 = vmatprep.mubr.bf16.mxu0 0
  %168 = vmatmul.mubr.bf16.gmra.mxu0 %v96
  %v169 = vpop.f32.mrf.mxu0
  %v170 = vadd.f32 0.0, %v169
  %v171 = vpop.f32.mrf.mxu0
  %v172 = vadd.f32 0.0, %v171
  %v173 = vpop.f32.mrf.mxu0
  %v174 = vadd.f32 0.0, %v173
  %v175 = vpop.f32.mrf.mxu0
  %v176 = vadd.f32 0.0, %v175
  %177 = vdwg.mxu0
  %v178 = vadd.s32 %v53, 8
  %v179 = vadd.s32 %v53, 16
  %v180 = vadd.s32 %v53, 24
  %v181 = vadd.s32 %v53, 32
  %v182 = vadd.s32 %v53, 40
  %v183 = vadd.s32 %v53, 48
  %v184 = vadd.s32 %v53, 56
  %v185 = vand.u32 %v53, 31
  %v186 = vand.u32 %v178, 31
  %v187 = vand.u32 %v179, 31
  %v188 = vand.u32 %v180, 31
  %v189 = vand.u32 %v181, 31
  %v190 = vand.u32 %v182, 31
  %v191 = vand.u32 %v183, 31
  %v192 = vand.u32 %v184, 31
  %v193 = vshra.s32 %v55, 3
  %v194 = vshra.s32 %v56, 3
  %vm195 = vcmp.eq.s32.totalorder %v185, %v193
  %vm196 = vcmp.eq.s32.totalorder %v185, %v194
  %vm197 = vcmp.eq.s32.totalorder %v186, %v193
  %vm198 = vcmp.eq.s32.totalorder %v186, %v194
  %vm199 = vcmp.eq.s32.totalorder %v187, %v193
  %vm200 = vcmp.eq.s32.totalorder %v187, %v194
  %vm201 = vcmp.eq.s32.totalorder %v188, %v193
  %vm202 = vcmp.eq.s32.totalorder %v188, %v194
  %vm203 = vcmp.eq.s32.totalorder %v189, %v193
  %vm204 = vcmp.eq.s32.totalorder %v189, %v194
  %vm205 = vcmp.eq.s32.totalorder %v190, %v193
  %vm206 = vcmp.eq.s32.totalorder %v190, %v194
  %vm207 = vcmp.eq.s32.totalorder %v191, %v193
  %vm208 = vcmp.eq.s32.totalorder %v191, %v194
  %vm209 = vcmp.eq.s32.totalorder %v192, %v193
  %vm210 = vcmp.eq.s32.totalorder %v192, %v194
  %v211 = vsel %vm195, 1.0, 0.0
  %v212 = vsel %vm196, 1.0, 0.0
  %v213 = vsel %vm197, 1.0, 0.0
  %v214 = vsel %vm198, 1.0, 0.0
  %v215 = vsel %vm199, 1.0, 0.0
  %v216 = vsel %vm200, 1.0, 0.0
  %v217 = vsel %vm201, 1.0, 0.0
  %v218 = vsel %vm202, 1.0, 0.0
  %v219 = vsel %vm203, 1.0, 0.0
  %v220 = vsel %vm204, 1.0, 0.0
  %v221 = vsel %vm205, 1.0, 0.0
  %v222 = vsel %vm206, 1.0, 0.0
  %v223 = vsel %vm207, 1.0, 0.0
  %v224 = vsel %vm208, 1.0, 0.0
  %v225 = vsel %vm209, 1.0, 0.0
  %v226 = vsel %vm210, 1.0, 0.0
  %v227 = vmul.f32 %v140, %v211
  %v228 = vmul.f32 %v142, %v212
  %v229 = vmul.f32 %v144, %v213
  %v230 = vmul.f32 %v146, %v214
  %v231 = vmul.f32 %v150, %v215
  %v232 = vmul.f32 %v152, %v216
  %v233 = vmul.f32 %v154, %v217
  %v234 = vmul.f32 %v156, %v218
  %v235 = vmul.f32 %v160, %v219
  %v236 = vmul.f32 %v162, %v220
  %v237 = vmul.f32 %v164, %v221
  %v238 = vmul.f32 %v166, %v222
  %v239 = vmul.f32 %v170, %v223
  %v240 = vmul.f32 %v172, %v224
  %v241 = vmul.f32 %v174, %v225
  %v242 = vmul.f32 %v176, %v226
  %v243 = vpack.c.bf16 %v229, %v227
  %v244 = vpack.c.bf16 %v230, %v228
  %v245 = vpack.c.bf16 %v233, %v231
  %v246 = vpack.c.bf16 %v234, %v232
  %v247 = vpack.c.bf16 %v237, %v235
  %v248 = vpack.c.bf16 %v238, %v236
  %v249 = vpack.c.bf16 %v241, %v239
  %v250 = vpack.c.bf16 %v242, %v240
  %v283 = vunpack.c.l.b16 %v20
  %v284 = vunpack.c.h.b16 %v20
  %v285 = vunpack.c.l.b16 %v21
  %v286 = vunpack.c.h.b16 %v21
  %v287 = vunpack.c.l.b16 %v22
  %v288 = vunpack.c.h.b16 %v22
  %v289 = vunpack.c.l.b16 %v23
  %v290 = vunpack.c.h.b16 %v23
  %v291 = vunpack.c.l.b16 %v24
  %v292 = vunpack.c.h.b16 %v24
  %v293 = vunpack.c.l.b16 %v25
  %v294 = vunpack.c.h.b16 %v25
  %v295 = vunpack.c.l.b16 %v26
  %v296 = vunpack.c.h.b16 %v26
  %v297 = vunpack.c.l.b16 %v27
  %v298 = vunpack.c.h.b16 %v27
  %v299 = vunpack.c.l.b16 %v28
  %v300 = vunpack.c.h.b16 %v28
  %v301 = vunpack.c.l.b16 %v29
  %v302 = vunpack.c.h.b16 %v29
  %v303 = vunpack.c.l.b16 %v30
  %v304 = vunpack.c.h.b16 %v30
  %v305 = vunpack.c.l.b16 %v31
  %v306 = vunpack.c.h.b16 %v31
  %v307 = vunpack.c.l.b16 %v32
  %v308 = vunpack.c.h.b16 %v32
  %v309 = vunpack.c.l.b16 %v33
  %v310 = vunpack.c.h.b16 %v33
  %v311 = vunpack.c.l.b16 %v34
  %v312 = vunpack.c.h.b16 %v34
  %v313 = vunpack.c.l.b16 %v35
  %v314 = vunpack.c.h.b16 %v35
  %v315 = vunpack.c.l.b16 %v36
  %v316 = vunpack.c.h.b16 %v36
  %v317 = vunpack.c.l.b16 %v37
  %v318 = vunpack.c.h.b16 %v37
  %v319 = vunpack.c.l.b16 %v38
  %v320 = vunpack.c.h.b16 %v38
  %v321 = vunpack.c.l.b16 %v39
  %v322 = vunpack.c.h.b16 %v39
  %v323 = vunpack.c.l.b16 %v40
  %v324 = vunpack.c.h.b16 %v40
  %v325 = vunpack.c.l.b16 %v41
  %v326 = vunpack.c.h.b16 %v41
  %v327 = vunpack.c.l.b16 %v42
  %v328 = vunpack.c.h.b16 %v42
  %v329 = vunpack.c.l.b16 %v43
  %v330 = vunpack.c.h.b16 %v43
  %v331 = vunpack.c.l.b16 %v44
  %v332 = vunpack.c.h.b16 %v44
  %v333 = vunpack.c.l.b16 %v45
  %v334 = vunpack.c.h.b16 %v45
  %v335 = vunpack.c.l.b16 %v46
  %v336 = vunpack.c.h.b16 %v46
  %v337 = vunpack.c.l.b16 %v47
  %v338 = vunpack.c.h.b16 %v47
  %v339 = vunpack.c.l.b16 %v48
  %v340 = vunpack.c.h.b16 %v48
  %v341 = vunpack.c.l.b16 %v49
  %v342 = vunpack.c.h.b16 %v49
  %v343 = vunpack.c.l.b16 %v50
  %v344 = vunpack.c.h.b16 %v50
  %v345 = vunpack.c.l.b16 %v51
  %v346 = vunpack.c.h.b16 %v51
  %v347 = vpack.c.b16 %v285, %v283
  %v348 = vpack.c.b16 %v286, %v284
  %v349 = vpack.c.b16 %v289, %v287
  %v350 = vpack.c.b16 %v290, %v288
  %v351 = vpack.c.b16 %v293, %v291
  %v352 = vpack.c.b16 %v294, %v292
  %v353 = vpack.c.b16 %v297, %v295
  %v354 = vpack.c.b16 %v298, %v296
  %v355 = vpack.c.b16 %v301, %v299
  %v356 = vpack.c.b16 %v302, %v300
  %v357 = vpack.c.b16 %v305, %v303
  %v358 = vpack.c.b16 %v306, %v304
  %v359 = vpack.c.b16 %v309, %v307
  %v360 = vpack.c.b16 %v310, %v308
  %v361 = vpack.c.b16 %v313, %v311
  %v362 = vpack.c.b16 %v314, %v312
  %v363 = vpack.c.b16 %v317, %v315
  %v364 = vpack.c.b16 %v318, %v316
  %v365 = vpack.c.b16 %v321, %v319
  %v366 = vpack.c.b16 %v322, %v320
  %v367 = vpack.c.b16 %v325, %v323
  %v368 = vpack.c.b16 %v326, %v324
  %v369 = vpack.c.b16 %v329, %v327
  %v370 = vpack.c.b16 %v330, %v328
  %v371 = vpack.c.b16 %v333, %v331
  %v372 = vpack.c.b16 %v334, %v332
  %v373 = vpack.c.b16 %v337, %v335
  %v374 = vpack.c.b16 %v338, %v336
  %v375 = vpack.c.b16 %v341, %v339
  %v376 = vpack.c.b16 %v342, %v340
  %v377 = vpack.c.b16 %v345, %v343
  %v378 = vpack.c.b16 %v346, %v344
  %411 = vmatprep.subr.bf16.mxu0 %v362
  %412 = vmatpush1.bf16.msra.mxu0 %v361
  %413 = vmatprep.subr.bf16.mxu0 %v360
  %414 = vmatpush1.bf16.msra.mxu0 %v359
  %415 = vmatprep.subr.bf16.mxu0 %v358
  %416 = vmatpush1.bf16.msra.mxu0 %v357
  %417 = vmatprep.subr.bf16.mxu0 %v356
  %418 = vmatpush1.bf16.msra.mxu0 %v355
  %419 = vmatprep.subr.bf16.mxu0 %v354
  %420 = vmatpush1.bf16.msra.mxu0 %v353
  %421 = vmatprep.subr.bf16.mxu0 %v352
  %422 = vmatpush1.bf16.msra.mxu0 %v351
  %423 = vmatprep.subr.bf16.mxu0 %v350
  %424 = vmatpush1.bf16.msra.mxu0 %v349
  %425 = vmatprep.subr.bf16.mxu0 %v348
  %426 = vmatpush1.bf16.msra.mxu0 %v347
  %427 = vmatprep.subr.bf16.mxu0 %v378
  %428 = vmatpush2.bf16.msra.mxu0 %v377
  %429 = vmatprep.subr.bf16.mxu0 %v376
  %430 = vmatpush2.bf16.msra.mxu0 %v375
  %431 = vmatprep.subr.bf16.mxu0 %v374
  %432 = vmatpush2.bf16.msra.mxu0 %v373
  %433 = vmatprep.subr.bf16.mxu0 %v372
  %434 = vmatpush2.bf16.msra.mxu0 %v371
  %435 = vmatprep.subr.bf16.mxu0 %v370
  %436 = vmatpush2.bf16.msra.mxu0 %v369
  %437 = vmatprep.subr.bf16.mxu0 %v368
  %438 = vmatpush2.bf16.msra.mxu0 %v367
  %439 = vmatprep.subr.bf16.mxu0 %v366
  %440 = vmatpush2.bf16.msra.mxu0 %v365
  %441 = vmatprep.subr.bf16.mxu0 %v364
  %442 = vmatpush2.bf16.msra.mxu0 %v363
  %443 = vmatprep.mubr.bf16.mxu0 %v244
  %444 = vmatmul.mubr.bf16.gmra.mxu0 %v243
  %v445 = vpop.f32.mrf.mxu0
  %v446 = vadd.f32 0.0, %v445
  %v447 = vpop.f32.mrf.mxu0
  %v448 = vadd.f32 0.0, %v447
  %v449 = vpop.f32.mrf.mxu0
  %v450 = vadd.f32 0.0, %v449
  %v451 = vpop.f32.mrf.mxu0
  %v452 = vadd.f32 0.0, %v451
  %453 = vmatprep.mubr.bf16.mxu0 %v246
  %454 = vmatmul.mubr.bf16.gmra.mxu0 %v245
  %v455 = vpop.f32.mrf.mxu0
  %v456 = vadd.f32 0.0, %v455
  %v457 = vpop.f32.mrf.mxu0
  %v458 = vadd.f32 0.0, %v457
  %v459 = vpop.f32.mrf.mxu0
  %v460 = vadd.f32 0.0, %v459
  %v461 = vpop.f32.mrf.mxu0
  %v462 = vadd.f32 0.0, %v461
  %463 = vmatprep.mubr.bf16.mxu0 %v248
  %464 = vmatmul.mubr.bf16.gmra.mxu0 %v247
  %v465 = vpop.f32.mrf.mxu0
  %v466 = vadd.f32 0.0, %v465
  %v467 = vpop.f32.mrf.mxu0
  %v468 = vadd.f32 0.0, %v467
  %v469 = vpop.f32.mrf.mxu0
  %v470 = vadd.f32 0.0, %v469
  %v471 = vpop.f32.mrf.mxu0
  %v472 = vadd.f32 0.0, %v471
  %473 = vmatprep.mubr.bf16.mxu0 %v250
  %474 = vmatmul.mubr.bf16.gmra.mxu0 %v249
  %v475 = vpop.f32.mrf.mxu0
  %v476 = vadd.f32 0.0, %v475
  %v477 = vpop.f32.mrf.mxu0
  %v478 = vadd.f32 0.0, %v477
  %v479 = vpop.f32.mrf.mxu0
  %v480 = vadd.f32 0.0, %v479
  %v481 = vpop.f32.mrf.mxu0
  %v482 = vadd.f32 0.0, %v481
  %483 = vdwg.mxu0
  %v484 = vshra.s32 %v55, 4
  %v485 = vshra.s32 %v56, 4
  %vm486 = vcmp.eq.s32.totalorder %v53, %v484
  %vm487 = vcmp.eq.s32.totalorder %v53, %v485
  %vm488 = vcmp.eq.s32.totalorder %v178, %v484
  %vm489 = vcmp.eq.s32.totalorder %v178, %v485
  %v490 = vsel %vm486, 1.0, 0.0
  %v491 = vsel %vm487, 1.0, 0.0
  %v492 = vsel %vm488, 1.0, 0.0
  %v493 = vsel %vm489, 1.0, 0.0
  %v494 = vadd.f32 %v446, %v450
  %v495 = vadd.f32 %v494, %v456
  %v496 = vadd.f32 %v495, %v460
  %v497 = vrot.slane %v496, 4
  %v498 = vadd.f32 %v496, %v497
  %v499 = vrot.slane %v498, 2
  %v500 = vadd.f32 %v498, %v499
  %v501 = vrot.slane %v500, 1
  %v502 = vadd.f32 %v500, %v501
  %vm503 = vcmask 261120
  %v504 = vsel %vm503, %v448, 0.0
  %v505 = vsel %vm503, %v452, 0.0
  %v506 = vadd.f32 %v504, %v505
  %v507 = vsel %vm503, %v458, 0.0
  %v508 = vadd.f32 %v506, %v507
  %v509 = vsel %vm503, %v462, 0.0
  %v510 = vadd.f32 %v508, %v509
  %v511 = vrot.slane %v510, 4
  %v512 = vadd.f32 %v510, %v511
  %v513 = vrot.slane %v512, 2
  %v514 = vadd.f32 %v512, %v513
  %v515 = vrot.slane %v514, 1
  %v516 = vadd.f32 %v514, %v515
  %v517 = vadd.f32 %v466, %v470
  %v518 = vadd.f32 %v517, %v476
  %v519 = vadd.f32 %v518, %v480
  %v520 = vrot.slane %v519, 4
  %v521 = vadd.f32 %v519, %v520
  %v522 = vrot.slane %v521, 2
  %v523 = vadd.f32 %v521, %v522
  %v524 = vrot.slane %v523, 1
  %v525 = vadd.f32 %v523, %v524
  %v526 = vsel %vm503, %v468, 0.0
  %v527 = vsel %vm503, %v472, 0.0
  %v528 = vadd.f32 %v526, %v527
  %v529 = vsel %vm503, %v478, 0.0
  %v530 = vadd.f32 %v528, %v529
  %v531 = vsel %vm503, %v482, 0.0
  %v532 = vadd.f32 %v530, %v531
  %v533 = vrot.slane %v532, 4
  %v534 = vadd.f32 %v532, %v533
  %v535 = vrot.slane %v534, 2
  %v536 = vadd.f32 %v534, %v535
  %v537 = vrot.slane %v536, 1
  %v538 = vadd.f32 %v536, %v537
  %v539 = vmul.f32 %v502, 0.03125
  %v540 = vmul.f32 %v516, 0.03125
  %v541 = vmul.f32 %v525, 0.03125
  %v542 = vmul.f32 %v538, 0.03125
  %v543 = vand.u32 2147483647, %v539
  %v544 = vand.u32 2147483647, %v540
  %v545 = vand.u32 2147483647, %v541
  %v546 = vand.u32 2147483647, %v542
  %v547 = vmul.f32 %v539, %v539
  %v548 = vmul.f32 %v540, %v540
  %v549 = vmul.f32 %v541, %v541
  %v550 = vmul.f32 %v542, %v542
  %v551 = vadd.f32 %v547, 1.0
  %v552 = vadd.f32 %v548, 1.0
  %v553 = vadd.f32 %v549, 1.0
  %v554 = vadd.f32 %v550, 1.0
  %v555 = vrcp.pop %v551
  %v556 = vrcp.pop %v552
  %v557 = vrcp.pop %v553
  %v558 = vrcp.pop %v554
  %v559 = vmul.f32 %v543, %v555
  %v560 = vmul.f32 %v544, %v556
  %v561 = vmul.f32 %v545, %v557
  %v562 = vmul.f32 %v546, %v558
  %v563 = vmul.f32 %v559, %v539
  %v564 = vmul.f32 %v560, %v540
  %v565 = vmul.f32 %v561, %v541
  %v566 = vmul.f32 %v562, %v542
  %v567 = vmul.f32 %v446, %v563
  %v568 = vmul.f32 %v448, %v564
  %v569 = vmul.f32 %v450, %v563
  %v570 = vmul.f32 %v452, %v564
  %v571 = vmul.f32 %v456, %v563
  %v572 = vmul.f32 %v458, %v564
  %v573 = vmul.f32 %v460, %v563
  %v574 = vmul.f32 %v462, %v564
  %v575 = vmul.f32 %v466, %v565
  %v576 = vmul.f32 %v468, %v566
  %v577 = vmul.f32 %v470, %v565
  %v578 = vmul.f32 %v472, %v566
  %v579 = vmul.f32 %v476, %v565
  %v580 = vmul.f32 %v478, %v566
  %v581 = vmul.f32 %v480, %v565
  %v582 = vmul.f32 %v482, %v566
  %v584 = vsel %vm503, %v568, 0
  %v587 = vsel %vm503, %v570, 0
  %v590 = vsel %vm503, %v572, 0
  %v593 = vsel %vm503, %v574, 0
  %v596 = vsel %vm503, %v576, 0
  %v599 = vsel %vm503, %v578, 0
  %v602 = vsel %vm503, %v580, 0
  %v605 = vsel %vm503, %v582, 0
  %v608 = vsel %vm503, %v491, 0
  %v611 = vsel %vm503, %v493, 0
  %613 = vmatprep.subr.mxu0 0.0
  %614 = vmatpush1.xpose.msra.mxu0 0.0
  %615 = vmatprep.subr.mxu0 0.0
  %616 = vmatpush1.xpose.msra.mxu0 0.0
  %617 = vmatprep.subr.mxu0 0.0
  %618 = vmatpush1.xpose.msra.mxu0 0.0
  %619 = vmatprep.subr.mxu0 0.0
  %620 = vmatpush1.xpose.msra.mxu0 0.0
  %621 = vmatprep.subr.mxu0 0.0
  %622 = vmatpush1.xpose.msra.mxu0 0.0
  %623 = vmatprep.subr.mxu0 0.0
  %624 = vmatpush1.xpose.msra.mxu0 0.0
  %625 = vmatprep.subr.mxu0 0.0
  %626 = vmatpush1.xpose.msra.mxu0 0.0
  %627 = vmatprep.subr.mxu0 0.0
  %628 = vmatpush1.xpose.msra.mxu0 0.0
  %629 = vmatprep.subr.mxu0 0.0
  %630 = vmatpush1.xpose.msra.mxu0 0.0
  %631 = vmatprep.subr.mxu0 0.0
  %632 = vmatpush1.xpose.msra.mxu0 0.0
  %633 = vmatprep.subr.mxu0 0.0
  %634 = vmatpush1.xpose.msra.mxu0 0.0
  %635 = vmatprep.subr.mxu0 0.0
  %636 = vmatpush1.xpose.msra.mxu0 0.0
  %637 = vmatprep.subr.mxu0 0.0
  %638 = vmatpush1.xpose.msra.mxu0 0.0
  %639 = vmatprep.subr.mxu0 0.0
  %640 = vmatpush1.xpose.msra.mxu0 0.0
  %641 = vmatprep.subr.mxu0 %v611
  %642 = vmatpush1.xpose.msra.mxu0 %v492
  %643 = vmatprep.subr.mxu0 %v608
  %644 = vmatpush1.xpose.msra.mxu0 %v490
  %645 = vmatprep.subr.mxu0 0.0
  %646 = vmatpush2.xpose.msra.mxu0 0.0
  %647 = vmatprep.subr.mxu0 0.0
  %648 = vmatpush2.xpose.msra.mxu0 0.0
  %649 = vmatprep.subr.mxu0 0.0
  %650 = vmatpush2.xpose.msra.mxu0 0.0
  %651 = vmatprep.subr.mxu0 0.0
  %652 = vmatpush2.xpose.msra.mxu0 0.0
  %653 = vmatprep.subr.mxu0 0.0
  %654 = vmatpush2.xpose.msra.mxu0 0.0
  %655 = vmatprep.subr.mxu0 0.0
  %656 = vmatpush2.xpose.msra.mxu0 0.0
  %657 = vmatprep.subr.mxu0 0.0
  %658 = vmatpush2.xpose.msra.mxu0 0.0
  %659 = vmatprep.subr.mxu0 0.0
  %660 = vmatpush2.xpose.msra.mxu0 0.0
  %661 = vmatprep.subr.mxu0 0.0
  %662 = vmatpush2.xpose.msra.mxu0 0.0
  %663 = vmatprep.subr.mxu0 0.0
  %664 = vmatpush2.xpose.msra.mxu0 0.0
  %665 = vmatprep.subr.mxu0 0.0
  %666 = vmatpush2.xpose.msra.mxu0 0.0
  %667 = vmatprep.subr.mxu0 0.0
  %668 = vmatpush2.xpose.msra.mxu0 0.0
  %669 = vmatprep.subr.mxu0 0.0
  %670 = vmatpush2.xpose.msra.mxu0 0.0
  %671 = vmatprep.subr.mxu0 0.0
  %672 = vmatpush2.xpose.msra.mxu0 0.0
  %673 = vmatprep.subr.mxu0 0.0
  %674 = vmatpush2.xpose.msra.mxu0 0.0
  %675 = vmatprep.subr.mxu0 0.0
  %676 = vmatpush2.xpose.msra.mxu0 0.0
  %677 = vmatprep.mubr.f32.mxu0 %v584
  %678 = vmatmul.mubr.f32.gmra.mxu0 %v567
  %v679 = vpop.f32.mrf.mxu0
  %v680 = vadd.f32 0.0, %v679
  %v681 = vpop.f32.mrf.mxu0
  %682 = vmatprep.mubr.f32.mxu0 %v587
  %683 = vmatmul.mubr.f32.gmra.mxu0 %v569
  %v684 = vpop.f32.mrf.mxu0
  %v685 = vadd.f32 0.0, %v684
  %v686 = vpop.f32.mrf.mxu0
  %687 = vmatprep.mubr.f32.mxu0 %v590
  %688 = vmatmul.mubr.f32.gmra.mxu0 %v571
  %v689 = vpop.f32.mrf.mxu0
  %v690 = vadd.f32 0.0, %v689
  %v691 = vpop.f32.mrf.mxu0
  %692 = vmatprep.mubr.f32.mxu0 %v593
  %693 = vmatmul.mubr.f32.gmra.mxu0 %v573
  %v694 = vpop.f32.mrf.mxu0
  %v695 = vadd.f32 0.0, %v694
  %v696 = vpop.f32.mrf.mxu0
  %697 = vmatprep.mubr.f32.mxu0 %v596
  %698 = vmatmul.mubr.f32.gmra.mxu0 %v575
  %v699 = vpop.f32.mrf.mxu0
  %v700 = vadd.f32 0.0, %v699
  %v701 = vpop.f32.mrf.mxu0
  %702 = vmatprep.mubr.f32.mxu0 %v599
  %703 = vmatmul.mubr.f32.gmra.mxu0 %v577
  %v704 = vpop.f32.mrf.mxu0
  %v705 = vadd.f32 0.0, %v704
  %v706 = vpop.f32.mrf.mxu0
  %707 = vmatprep.mubr.f32.mxu0 %v602
  %708 = vmatmul.mubr.f32.gmra.mxu0 %v579
  %v709 = vpop.f32.mrf.mxu0
  %v710 = vadd.f32 0.0, %v709
  %v711 = vpop.f32.mrf.mxu0
  %712 = vmatprep.mubr.f32.mxu0 %v605
  %713 = vmatmul.mubr.f32.gmra.mxu0 %v581
  %v714 = vpop.f32.mrf.mxu0
  %v715 = vadd.f32 0.0, %v714
  %v716 = vpop.f32.mrf.mxu0
  %717 = vdwg.mxu0
  %vm718 = vcmask 80896
  %v719 = vsel %vm718, %v680, -inf
  %v720 = vsel %vm718, %v685, -inf
  %v721 = vsel %vm718, %v690, -inf
  %v722 = vmax.f32 %v719, %v721
  %v723 = vsel %vm718, %v695, -inf
  %v724 = vmax.f32 %v720, %v723
  %v725 = vmax.f32 %v722, %v724
  %v726 = vrot.slane %v725, 4
  %v727 = vmax.f32 %v725, %v726
  %v728 = vrot.slane %v727, 2
  %v729 = vmax.f32 %v727, %v728
  %v730 = vrot.slane %v729, 1
  %v731 = vmax.f32 %v729, %v730
  %v732 = vsel %vm718, %v700, -inf
  %v733 = vsel %vm718, %v705, -inf
  %v734 = vsel %vm718, %v710, -inf
  %v735 = vmax.f32 %v732, %v734
  %v736 = vsel %vm718, %v715, -inf
  %v737 = vmax.f32 %v733, %v736
  %v738 = vmax.f32 %v735, %v737
  %v739 = vrot.slane %v738, 4
  %v740 = vmax.f32 %v738, %v739
  %v741 = vrot.slane %v740, 2
  %v742 = vmax.f32 %v740, %v741
  %v743 = vrot.slane %v742, 1
  %v744 = vmax.f32 %v742, %v743
  %v745 = vsub.f32 %v680, %v731
  %v746 = vsub.f32 %v685, %v731
  %v747 = vsub.f32 %v690, %v731
  %v748 = vsub.f32 %v695, %v731
  %v749 = vsub.f32 %v700, %v744
  %v750 = vsub.f32 %v705, %v744
  %v751 = vsub.f32 %v710, %v744
  %v752 = vsub.f32 %v715, %v744
  %v753 = vmul.f32 %v745, 1.442695
  %v754 = vpow.pop %v753
  %v755 = vmul.f32 %v746, 1.442695
  %v756 = vpow.pop %v755
  %v757 = vmul.f32 %v747, 1.442695
  %v758 = vpow.pop %v757
  %v759 = vmul.f32 %v748, 1.442695
  %v760 = vpow.pop %v759
  %v761 = vmul.f32 %v749, 1.442695
  %v762 = vpow.pop %v761
  %v763 = vmul.f32 %v750, 1.442695
  %v764 = vpow.pop %v763
  %v765 = vmul.f32 %v751, 1.442695
  %v766 = vpow.pop %v765
  %v767 = vmul.f32 %v752, 1.442695
  %v768 = vpow.pop %v767
  %v769 = vsel %vm718, %v754, 0.0
  %v770 = vsel %vm718, %v756, 0.0
  %v771 = vadd.f32 %v769, %v770
  %v772 = vsel %vm718, %v758, 0.0
  %v773 = vadd.f32 %v771, %v772
  %v774 = vsel %vm718, %v760, 0.0
  %v775 = vadd.f32 %v773, %v774
  %v776 = vrot.slane %v775, 4
  %v777 = vadd.f32 %v775, %v776
  %v778 = vrot.slane %v777, 2
  %v779 = vadd.f32 %v777, %v778
  %v780 = vrot.slane %v779, 1
  %v781 = vadd.f32 %v779, %v780
  %v782 = vsel %vm718, %v762, 0.0
  %v783 = vsel %vm718, %v764, 0.0
  %v784 = vadd.f32 %v782, %v783
  %v785 = vsel %vm718, %v766, 0.0
  %v786 = vadd.f32 %v784, %v785
  %v787 = vsel %vm718, %v768, 0.0
  %v788 = vadd.f32 %v786, %v787
  %v789 = vrot.slane %v788, 4
  %v790 = vadd.f32 %v788, %v789
  %v791 = vrot.slane %v790, 2
  %v792 = vadd.f32 %v790, %v791
  %v793 = vrot.slane %v792, 1
  %v794 = vadd.f32 %v792, %v793
  %v795 = vrcp.pop %v781
  %v796 = vmul.f32 %v754, %v795
  %v797 = vmul.f32 %v756, %v795
  %v798 = vmul.f32 %v758, %v795
  %v799 = vmul.f32 %v760, %v795
  %v800 = vrcp.pop %v794
  %v801 = vmul.f32 %v762, %v800
  %v802 = vmul.f32 %v764, %v800
  %v803 = vmul.f32 %v766, %v800
  %v804 = vmul.f32 %v768, %v800
  %v806 = vsel %vm718, %v796, 0
  %v809 = vsel %vm718, %v797, 0
  %v812 = vsel %vm718, %v798, 0
  %v815 = vsel %vm718, %v799, 0
  %v818 = vsel %vm718, %v801, 0
  %v821 = vsel %vm718, %v802, 0
  %v824 = vsel %vm718, %v803, 0
  %v827 = vsel %vm718, %v804, 0
  %vm829 = vcmask 1041408
  %v831 = vsel %vm829, %v492, 0
  %v833 = vsel %vm829, %v493, 0
  %835 = vmatprep.subr.mxu0 0.0
  %836 = vmatpush1.msra.mxu0 0.0
  %837 = vmatprep.subr.mxu0 0.0
  %838 = vmatpush1.msra.mxu0 0.0
  %839 = vmatprep.subr.mxu0 0.0
  %840 = vmatpush1.msra.mxu0 0.0
  %841 = vmatprep.subr.mxu0 0.0
  %842 = vmatpush1.msra.mxu0 0.0
  %843 = vmatprep.subr.mxu0 0.0
  %844 = vmatpush1.msra.mxu0 0.0
  %845 = vmatprep.subr.mxu0 0.0
  %846 = vmatpush1.msra.mxu0 0.0
  %847 = vmatprep.subr.mxu0 0.0
  %848 = vmatpush1.msra.mxu0 0.0
  %849 = vmatprep.subr.mxu0 0.0
  %850 = vmatpush1.msra.mxu0 0.0
  %851 = vmatprep.subr.mxu0 0.0
  %852 = vmatpush1.msra.mxu0 0.0
  %853 = vmatprep.subr.mxu0 0.0
  %854 = vmatpush1.msra.mxu0 0.0
  %855 = vmatprep.subr.mxu0 0.0
  %856 = vmatpush1.msra.mxu0 0.0
  %857 = vmatprep.subr.mxu0 0.0
  %858 = vmatpush1.msra.mxu0 0.0
  %859 = vmatprep.subr.mxu0 0.0
  %860 = vmatpush1.msra.mxu0 0.0
  %861 = vmatprep.subr.mxu0 0.0
  %862 = vmatpush1.msra.mxu0 0.0
  %863 = vmatprep.subr.mxu0 %v833
  %864 = vmatpush1.msra.mxu0 %v831
  %865 = vmatprep.subr.mxu0 %v491
  %866 = vmatpush1.msra.mxu0 %v490
  %867 = vmatprep.subr.mxu0 0.0
  %868 = vmatpush2.msra.mxu0 0.0
  %869 = vmatprep.subr.mxu0 0.0
  %870 = vmatpush2.msra.mxu0 0.0
  %871 = vmatprep.subr.mxu0 0.0
  %872 = vmatpush2.msra.mxu0 0.0
  %873 = vmatprep.subr.mxu0 0.0
  %874 = vmatpush2.msra.mxu0 0.0
  %875 = vmatprep.subr.mxu0 0.0
  %876 = vmatpush2.msra.mxu0 0.0
  %877 = vmatprep.subr.mxu0 0.0
  %878 = vmatpush2.msra.mxu0 0.0
  %879 = vmatprep.subr.mxu0 0.0
  %880 = vmatpush2.msra.mxu0 0.0
  %881 = vmatprep.subr.mxu0 0.0
  %882 = vmatpush2.msra.mxu0 0.0
  %883 = vmatprep.subr.mxu0 0.0
  %884 = vmatpush2.msra.mxu0 0.0
  %885 = vmatprep.subr.mxu0 0.0
  %886 = vmatpush2.msra.mxu0 0.0
  %887 = vmatprep.subr.mxu0 0.0
  %888 = vmatpush2.msra.mxu0 0.0
  %889 = vmatprep.subr.mxu0 0.0
  %890 = vmatpush2.msra.mxu0 0.0
  %891 = vmatprep.subr.mxu0 0.0
  %892 = vmatpush2.msra.mxu0 0.0
  %893 = vmatprep.subr.mxu0 0.0
  %894 = vmatpush2.msra.mxu0 0.0
  %895 = vmatprep.subr.mxu0 0.0
  %896 = vmatpush2.msra.mxu0 0.0
  %897 = vmatprep.subr.mxu0 0.0
  %898 = vmatpush2.msra.mxu0 0.0
  %899 = vmatprep.mubr.f32.mxu0 0.0
  %900 = vmatmul.mubr.f32.gmra.mxu0 %v806
  %v901 = vpop.f32.mrf.mxu0
  %v902 = vadd.f32 0.0, %v901
  %v903 = vpop.f32.mrf.mxu0
  %v904 = vadd.f32 0.0, %v903
  %905 = vmatprep.mubr.f32.mxu0 0.0
  %906 = vmatmul.mubr.f32.gmra.mxu0 %v809
  %v907 = vpop.f32.mrf.mxu0
  %v908 = vadd.f32 0.0, %v907
  %v909 = vpop.f32.mrf.mxu0
  %v910 = vadd.f32 0.0, %v909
  %911 = vmatprep.mubr.f32.mxu0 0.0
  %912 = vmatmul.mubr.f32.gmra.mxu0 %v812
  %v913 = vpop.f32.mrf.mxu0
  %v914 = vadd.f32 0.0, %v913
  %v915 = vpop.f32.mrf.mxu0
  %v916 = vadd.f32 0.0, %v915
  %917 = vmatprep.mubr.f32.mxu0 0.0
  %918 = vmatmul.mubr.f32.gmra.mxu0 %v815
  %v919 = vpop.f32.mrf.mxu0
  %v920 = vadd.f32 0.0, %v919
  %v921 = vpop.f32.mrf.mxu0
  %v922 = vadd.f32 0.0, %v921
  %923 = vmatprep.mubr.f32.mxu0 0.0
  %924 = vmatmul.mubr.f32.gmra.mxu0 %v818
  %v925 = vpop.f32.mrf.mxu0
  %v926 = vadd.f32 0.0, %v925
  %v927 = vpop.f32.mrf.mxu0
  %v928 = vadd.f32 0.0, %v927
  %929 = vmatprep.mubr.f32.mxu0 0.0
  %930 = vmatmul.mubr.f32.gmra.mxu0 %v821
  %v931 = vpop.f32.mrf.mxu0
  %v932 = vadd.f32 0.0, %v931
  %v933 = vpop.f32.mrf.mxu0
  %v934 = vadd.f32 0.0, %v933
  %935 = vmatprep.mubr.f32.mxu0 0.0
  %936 = vmatmul.mubr.f32.gmra.mxu0 %v824
  %v937 = vpop.f32.mrf.mxu0
  %v938 = vadd.f32 0.0, %v937
  %v939 = vpop.f32.mrf.mxu0
  %v940 = vadd.f32 0.0, %v939
  %941 = vmatprep.mubr.f32.mxu0 0.0
  %942 = vmatmul.mubr.f32.gmra.mxu0 %v827
  %v943 = vpop.f32.mrf.mxu0
  %v944 = vadd.f32 0.0, %v943
  %v945 = vpop.f32.mrf.mxu0
  %v946 = vadd.f32 0.0, %v945
  %947 = vdwg.mxu0
  %v948 = vmul.f32 %v902, %v446
  %v949 = vmul.f32 %v904, %v448
  %v950 = vmul.f32 %v908, %v450
  %v951 = vmul.f32 %v910, %v452
  %v952 = vmul.f32 %v914, %v456
  %v953 = vmul.f32 %v916, %v458
  %v954 = vmul.f32 %v920, %v460
  %v955 = vmul.f32 %v922, %v462
  %v956 = vmul.f32 %v926, %v466
  %v957 = vmul.f32 %v928, %v468
  %v958 = vmul.f32 %v932, %v470
  %v959 = vmul.f32 %v934, %v472
  %v960 = vmul.f32 %v938, %v476
  %v961 = vmul.f32 %v940, %v478
  %v962 = vmul.f32 %v944, %v480
  %v963 = vmul.f32 %v946, %v482
  %v964 = vadd.f32 %v948, %v950
  %v965 = vadd.f32 %v964, %v952
  %v966 = vadd.f32 %v965, %v954
  %v967 = vrot.slane %v966, 4
  %v968 = vadd.f32 %v966, %v967
  %v969 = vrot.slane %v968, 2
  %v970 = vadd.f32 %v968, %v969
  %v971 = vrot.slane %v970, 1
  %v972 = vadd.f32 %v970, %v971
  %v973 = vsel %vm503, %v949, 0.0
  %v974 = vsel %vm503, %v951, 0.0
  %v975 = vadd.f32 %v973, %v974
  %v976 = vsel %vm503, %v953, 0.0
  %v977 = vadd.f32 %v975, %v976
  %v978 = vsel %vm503, %v955, 0.0
  %v979 = vadd.f32 %v977, %v978
  %v980 = vrot.slane %v979, 4
  %v981 = vadd.f32 %v979, %v980
  %v982 = vrot.slane %v981, 2
  %v983 = vadd.f32 %v981, %v982
  %v984 = vrot.slane %v983, 1
  %v985 = vadd.f32 %v983, %v984
  %v986 = vadd.f32 %v956, %v958
  %v987 = vadd.f32 %v986, %v960
  %v988 = vadd.f32 %v987, %v962
  %v989 = vrot.slane %v988, 4
  %v990 = vadd.f32 %v988, %v989
  %v991 = vrot.slane %v990, 2
  %v992 = vadd.f32 %v990, %v991
  %v993 = vrot.slane %v992, 1
  %v994 = vadd.f32 %v992, %v993
  %v995 = vsel %vm503, %v957, 0.0
  %v996 = vsel %vm503, %v959, 0.0
  %v997 = vadd.f32 %v995, %v996
  %v998 = vsel %vm503, %v961, 0.0
  %v999 = vadd.f32 %v997, %v998
  %v1000 = vsel %vm503, %v963, 0.0
  %v1001 = vadd.f32 %v999, %v1000
  %v1002 = vrot.slane %v1001, 4
  %v1003 = vadd.f32 %v1001, %v1002
  %v1004 = vrot.slane %v1003, 2
  %v1005 = vadd.f32 %v1003, %v1004
  %v1006 = vrot.slane %v1005, 1
  %v1007 = vadd.f32 %v1005, %v1006
  %v1008 = vand.u32 2147483647, %v972
  %v1009 = vand.u32 2147483647, %v985
  %v1010 = vand.u32 2147483647, %v994
  %v1011 = vand.u32 2147483647, %v1007
  %v1012 = vmul.f32 %v972, %v972
  %v1013 = vmul.f32 %v985, %v985
  %v1014 = vmul.f32 %v994, %v994
  %v1015 = vmul.f32 %v1007, %v1007
  %v1016 = vadd.f32 %v1012, 1.0
  %v1017 = vadd.f32 %v1013, 1.0
  %v1018 = vadd.f32 %v1014, 1.0
  %v1019 = vadd.f32 %v1015, 1.0
  %v1020 = vrcp.pop %v1016
  %v1021 = vrcp.pop %v1017
  %v1022 = vrcp.pop %v1018
  %v1023 = vrcp.pop %v1019
  %v1024 = vmul.f32 %v1008, %v1020
  %v1025 = vmul.f32 %v1009, %v1021
  %v1026 = vmul.f32 %v1010, %v1022
  %v1027 = vmul.f32 %v1011, %v1023
  %v1028 = vmul.f32 %v1024, %v972
  %v1029 = vmul.f32 %v1025, %v985
  %v1030 = vmul.f32 %v1026, %v994
  %v1031 = vmul.f32 %v1027, %v1007
  %v1032 = vmul.f32 %v446, %v1028
  %v1033 = vmul.f32 %v448, %v1029
  %v1034 = vmul.f32 %v450, %v1028
  %v1035 = vmul.f32 %v452, %v1029
  %v1036 = vmul.f32 %v456, %v1028
  %v1037 = vmul.f32 %v458, %v1029
  %v1038 = vmul.f32 %v460, %v1028
  %v1039 = vmul.f32 %v462, %v1029
  %v1040 = vmul.f32 %v466, %v1030
  %v1041 = vmul.f32 %v468, %v1031
  %v1042 = vmul.f32 %v470, %v1030
  %v1043 = vmul.f32 %v472, %v1031
  %v1044 = vmul.f32 %v476, %v1030
  %v1045 = vmul.f32 %v478, %v1031
  %v1046 = vmul.f32 %v480, %v1030
  %v1047 = vmul.f32 %v482, %v1031
  %v1049 = vsel %vm503, %v1033, 0
  %v1052 = vsel %vm503, %v1035, 0
  %v1055 = vsel %vm503, %v1037, 0
  %v1058 = vsel %vm503, %v1039, 0
  %v1061 = vsel %vm503, %v1041, 0
  %v1064 = vsel %vm503, %v1043, 0
  %v1067 = vsel %vm503, %v1045, 0
  %v1070 = vsel %vm503, %v1047, 0
  %1072 = vmatprep.subr.mxu0 0.0
  %1073 = vmatpush1.xpose.msra.mxu0 0.0
  %1074 = vmatprep.subr.mxu0 0.0
  %1075 = vmatpush1.xpose.msra.mxu0 0.0
  %1076 = vmatprep.subr.mxu0 0.0
  %1077 = vmatpush1.xpose.msra.mxu0 0.0
  %1078 = vmatprep.subr.mxu0 0.0
  %1079 = vmatpush1.xpose.msra.mxu0 0.0
  %1080 = vmatprep.subr.mxu0 0.0
  %1081 = vmatpush1.xpose.msra.mxu0 0.0
  %1082 = vmatprep.subr.mxu0 0.0
  %1083 = vmatpush1.xpose.msra.mxu0 0.0
  %1084 = vmatprep.subr.mxu0 0.0
  %1085 = vmatpush1.xpose.msra.mxu0 0.0
  %1086 = vmatprep.subr.mxu0 0.0
  %1087 = vmatpush1.xpose.msra.mxu0 0.0
  %1088 = vmatprep.subr.mxu0 0.0
  %1089 = vmatpush1.xpose.msra.mxu0 0.0
  %1090 = vmatprep.subr.mxu0 0.0
  %1091 = vmatpush1.xpose.msra.mxu0 0.0
  %1092 = vmatprep.subr.mxu0 0.0
  %1093 = vmatpush1.xpose.msra.mxu0 0.0
  %1094 = vmatprep.subr.mxu0 0.0
  %1095 = vmatpush1.xpose.msra.mxu0 0.0
  %1096 = vmatprep.subr.mxu0 0.0
  %1097 = vmatpush1.xpose.msra.mxu0 0.0
  %1098 = vmatprep.subr.mxu0 0.0
  %1099 = vmatpush1.xpose.msra.mxu0 0.0
  %1100 = vmatprep.subr.mxu0 %v611
  %1101 = vmatpush1.xpose.msra.mxu0 %v492
  %1102 = vmatprep.subr.mxu0 %v608
  %1103 = vmatpush1.xpose.msra.mxu0 %v490
  %1104 = vmatprep.subr.mxu0 0.0
  %1105 = vmatpush2.xpose.msra.mxu0 0.0
  %1106 = vmatprep.subr.mxu0 0.0
  %1107 = vmatpush2.xpose.msra.mxu0 0.0
  %1108 = vmatprep.subr.mxu0 0.0
  %1109 = vmatpush2.xpose.msra.mxu0 0.0
  %1110 = vmatprep.subr.mxu0 0.0
  %1111 = vmatpush2.xpose.msra.mxu0 0.0
  %1112 = vmatprep.subr.mxu0 0.0
  %1113 = vmatpush2.xpose.msra.mxu0 0.0
  %1114 = vmatprep.subr.mxu0 0.0
  %1115 = vmatpush2.xpose.msra.mxu0 0.0
  %1116 = vmatprep.subr.mxu0 0.0
  %1117 = vmatpush2.xpose.msra.mxu0 0.0
  %1118 = vmatprep.subr.mxu0 0.0
  %1119 = vmatpush2.xpose.msra.mxu0 0.0
  %1120 = vmatprep.subr.mxu0 0.0
  %1121 = vmatpush2.xpose.msra.mxu0 0.0
  %1122 = vmatprep.subr.mxu0 0.0
  %1123 = vmatpush2.xpose.msra.mxu0 0.0
  %1124 = vmatprep.subr.mxu0 0.0
  %1125 = vmatpush2.xpose.msra.mxu0 0.0
  %1126 = vmatprep.subr.mxu0 0.0
  %1127 = vmatpush2.xpose.msra.mxu0 0.0
  %1128 = vmatprep.subr.mxu0 0.0
  %1129 = vmatpush2.xpose.msra.mxu0 0.0
  %1130 = vmatprep.subr.mxu0 0.0
  %1131 = vmatpush2.xpose.msra.mxu0 0.0
  %1132 = vmatprep.subr.mxu0 0.0
  %1133 = vmatpush2.xpose.msra.mxu0 0.0
  %1134 = vmatprep.subr.mxu0 0.0
  %1135 = vmatpush2.xpose.msra.mxu0 0.0
  %1136 = vmatprep.mubr.f32.mxu0 %v1049
  %1137 = vmatmul.mubr.f32.gmra.mxu0 %v1032
  %v1138 = vpop.f32.mrf.mxu0
  %v1139 = vadd.f32 0.0, %v1138
  %v1140 = vpop.f32.mrf.mxu0
  %1141 = vmatprep.mubr.f32.mxu0 %v1052
  %1142 = vmatmul.mubr.f32.gmra.mxu0 %v1034
  %v1143 = vpop.f32.mrf.mxu0
  %v1144 = vadd.f32 0.0, %v1143
  %v1145 = vpop.f32.mrf.mxu0
  %1146 = vmatprep.mubr.f32.mxu0 %v1055
  %1147 = vmatmul.mubr.f32.gmra.mxu0 %v1036
  %v1148 = vpop.f32.mrf.mxu0
  %v1149 = vadd.f32 0.0, %v1148
  %v1150 = vpop.f32.mrf.mxu0
  %1151 = vmatprep.mubr.f32.mxu0 %v1058
  %1152 = vmatmul.mubr.f32.gmra.mxu0 %v1038
  %v1153 = vpop.f32.mrf.mxu0
  %v1154 = vadd.f32 0.0, %v1153
  %v1155 = vpop.f32.mrf.mxu0
  %1156 = vmatprep.mubr.f32.mxu0 %v1061
  %1157 = vmatmul.mubr.f32.gmra.mxu0 %v1040
  %v1158 = vpop.f32.mrf.mxu0
  %v1159 = vadd.f32 0.0, %v1158
  %v1160 = vpop.f32.mrf.mxu0
  %1161 = vmatprep.mubr.f32.mxu0 %v1064
  %1162 = vmatmul.mubr.f32.gmra.mxu0 %v1042
  %v1163 = vpop.f32.mrf.mxu0
  %v1164 = vadd.f32 0.0, %v1163
  %v1165 = vpop.f32.mrf.mxu0
  %1166 = vmatprep.mubr.f32.mxu0 %v1067
  %1167 = vmatmul.mubr.f32.gmra.mxu0 %v1044
  %v1168 = vpop.f32.mrf.mxu0
  %v1169 = vadd.f32 0.0, %v1168
  %v1170 = vpop.f32.mrf.mxu0
  %1171 = vmatprep.mubr.f32.mxu0 %v1070
  %1172 = vmatmul.mubr.f32.gmra.mxu0 %v1046
  %v1173 = vpop.f32.mrf.mxu0
  %v1174 = vadd.f32 0.0, %v1173
  %v1175 = vpop.f32.mrf.mxu0
  %1176 = vdwg.mxu0
  %v1177 = vadd.f32 %v680, %v1139
  %v1178 = vadd.f32 %v685, %v1144
  %v1179 = vadd.f32 %v690, %v1149
  %v1180 = vadd.f32 %v695, %v1154
  %v1181 = vadd.f32 %v700, %v1159
  %v1182 = vadd.f32 %v705, %v1164
  %v1183 = vadd.f32 %v710, %v1169
  %v1184 = vadd.f32 %v715, %v1174
  %v1185 = vsel %vm718, %v1177, -inf
  %v1186 = vsel %vm718, %v1178, -inf
  %v1187 = vsel %vm718, %v1179, -inf
  %v1188 = vmax.f32 %v1185, %v1187
  %v1189 = vsel %vm718, %v1180, -inf
  %v1190 = vmax.f32 %v1186, %v1189
  %v1191 = vmax.f32 %v1188, %v1190
  %v1192 = vrot.slane %v1191, 4
  %v1193 = vmax.f32 %v1191, %v1192
  %v1194 = vrot.slane %v1193, 2
  %v1195 = vmax.f32 %v1193, %v1194
  %v1196 = vrot.slane %v1195, 1
  %v1197 = vmax.f32 %v1195, %v1196
  %v1198 = vsel %vm718, %v1181, -inf
  %v1199 = vsel %vm718, %v1182, -inf
  %v1200 = vsel %vm718, %v1183, -inf
  %v1201 = vmax.f32 %v1198, %v1200
  %v1202 = vsel %vm718, %v1184, -inf
  %v1203 = vmax.f32 %v1199, %v1202
  %v1204 = vmax.f32 %v1201, %v1203
  %v1205 = vrot.slane %v1204, 4
  %v1206 = vmax.f32 %v1204, %v1205
  %v1207 = vrot.slane %v1206, 2
  %v1208 = vmax.f32 %v1206, %v1207
  %v1209 = vrot.slane %v1208, 1
  %v1210 = vmax.f32 %v1208, %v1209
  %v1211 = vsub.f32 %v1177, %v1197
  %v1212 = vsub.f32 %v1178, %v1197
  %v1213 = vsub.f32 %v1179, %v1197
  %v1214 = vsub.f32 %v1180, %v1197
  %v1215 = vsub.f32 %v1181, %v1210
  %v1216 = vsub.f32 %v1182, %v1210
  %v1217 = vsub.f32 %v1183, %v1210
  %v1218 = vsub.f32 %v1184, %v1210
  %v1219 = vmul.f32 %v1211, 1.442695
  %v1220 = vpow.pop %v1219
  %v1221 = vmul.f32 %v1212, 1.442695
  %v1222 = vpow.pop %v1221
  %v1223 = vmul.f32 %v1213, 1.442695
  %v1224 = vpow.pop %v1223
  %v1225 = vmul.f32 %v1214, 1.442695
  %v1226 = vpow.pop %v1225
  %v1227 = vmul.f32 %v1215, 1.442695
  %v1228 = vpow.pop %v1227
  %v1229 = vmul.f32 %v1216, 1.442695
  %v1230 = vpow.pop %v1229
  %v1231 = vmul.f32 %v1217, 1.442695
  %v1232 = vpow.pop %v1231
  %v1233 = vmul.f32 %v1218, 1.442695
  %v1234 = vpow.pop %v1233
  %v1235 = vsel %vm718, %v1220, 0.0
  %v1236 = vsel %vm718, %v1222, 0.0
  %v1237 = vadd.f32 %v1235, %v1236
  %v1238 = vsel %vm718, %v1224, 0.0
  %v1239 = vadd.f32 %v1237, %v1238
  %v1240 = vsel %vm718, %v1226, 0.0
  %v1241 = vadd.f32 %v1239, %v1240
  %v1242 = vrot.slane %v1241, 4
  %v1243 = vadd.f32 %v1241, %v1242
  %v1244 = vrot.slane %v1243, 2
  %v1245 = vadd.f32 %v1243, %v1244
  %v1246 = vrot.slane %v1245, 1
  %v1247 = vadd.f32 %v1245, %v1246
  %v1248 = vsel %vm718, %v1228, 0.0
  %v1249 = vsel %vm718, %v1230, 0.0
  %v1250 = vadd.f32 %v1248, %v1249
  %v1251 = vsel %vm718, %v1232, 0.0
  %v1252 = vadd.f32 %v1250, %v1251
  %v1253 = vsel %vm718, %v1234, 0.0
  %v1254 = vadd.f32 %v1252, %v1253
  %v1255 = vrot.slane %v1254, 4
  %v1256 = vadd.f32 %v1254, %v1255
  %v1257 = vrot.slane %v1256, 2
  %v1258 = vadd.f32 %v1256, %v1257
  %v1259 = vrot.slane %v1258, 1
  %v1260 = vadd.f32 %v1258, %v1259
  %v1261 = vrcp.pop %v1247
  %v1262 = vmul.f32 %v1220, %v1261
  %v1263 = vmul.f32 %v1222, %v1261
  %v1264 = vmul.f32 %v1224, %v1261
  %v1265 = vmul.f32 %v1226, %v1261
  %v1266 = vrcp.pop %v1260
  %v1267 = vmul.f32 %v1228, %v1266
  %v1268 = vmul.f32 %v1230, %v1266
  %v1269 = vmul.f32 %v1232, %v1266
  %v1270 = vmul.f32 %v1234, %v1266
  %v1272 = vsel %vm718, %v1262, 0
  %v1275 = vsel %vm718, %v1263, 0
  %v1278 = vsel %vm718, %v1264, 0
  %v1281 = vsel %vm718, %v1265, 0
  %v1284 = vsel %vm718, %v1267, 0
  %v1287 = vsel %vm718, %v1268, 0
  %v1290 = vsel %vm718, %v1269, 0
  %v1293 = vsel %vm718, %v1270, 0
  %1295 = vmatprep.subr.mxu0 0.0
  %1296 = vmatpush1.msra.mxu0 0.0
  %1297 = vmatprep.subr.mxu0 0.0
  %1298 = vmatpush1.msra.mxu0 0.0
  %1299 = vmatprep.subr.mxu0 0.0
  %1300 = vmatpush1.msra.mxu0 0.0
  %1301 = vmatprep.subr.mxu0 0.0
  %1302 = vmatpush1.msra.mxu0 0.0
  %1303 = vmatprep.subr.mxu0 0.0
  %1304 = vmatpush1.msra.mxu0 0.0
  %1305 = vmatprep.subr.mxu0 0.0
  %1306 = vmatpush1.msra.mxu0 0.0
  %1307 = vmatprep.subr.mxu0 0.0
  %1308 = vmatpush1.msra.mxu0 0.0
  %1309 = vmatprep.subr.mxu0 0.0
  %1310 = vmatpush1.msra.mxu0 0.0
  %1311 = vmatprep.subr.mxu0 0.0
  %1312 = vmatpush1.msra.mxu0 0.0
  %1313 = vmatprep.subr.mxu0 0.0
  %1314 = vmatpush1.msra.mxu0 0.0
  %1315 = vmatprep.subr.mxu0 0.0
  %1316 = vmatpush1.msra.mxu0 0.0
  %1317 = vmatprep.subr.mxu0 0.0
  %1318 = vmatpush1.msra.mxu0 0.0
  %1319 = vmatprep.subr.mxu0 0.0
  %1320 = vmatpush1.msra.mxu0 0.0
  %1321 = vmatprep.subr.mxu0 0.0
  %1322 = vmatpush1.msra.mxu0 0.0
  %1323 = vmatprep.subr.mxu0 %v833
  %1324 = vmatpush1.msra.mxu0 %v831
  %1325 = vmatprep.subr.mxu0 %v491
  %1326 = vmatpush1.msra.mxu0 %v490
  %1327 = vmatprep.subr.mxu0 0.0
  %1328 = vmatpush2.msra.mxu0 0.0
  %1329 = vmatprep.subr.mxu0 0.0
  %1330 = vmatpush2.msra.mxu0 0.0
  %1331 = vmatprep.subr.mxu0 0.0
  %1332 = vmatpush2.msra.mxu0 0.0
  %1333 = vmatprep.subr.mxu0 0.0
  %1334 = vmatpush2.msra.mxu0 0.0
  %1335 = vmatprep.subr.mxu0 0.0
  %1336 = vmatpush2.msra.mxu0 0.0
  %1337 = vmatprep.subr.mxu0 0.0
  %1338 = vmatpush2.msra.mxu0 0.0
  %1339 = vmatprep.subr.mxu0 0.0
  %1340 = vmatpush2.msra.mxu0 0.0
  %1341 = vmatprep.subr.mxu0 0.0
  %1342 = vmatpush2.msra.mxu0 0.0
  %1343 = vmatprep.subr.mxu0 0.0
  %1344 = vmatpush2.msra.mxu0 0.0
  %1345 = vmatprep.subr.mxu0 0.0
  %1346 = vmatpush2.msra.mxu0 0.0
  %1347 = vmatprep.subr.mxu0 0.0
  %1348 = vmatpush2.msra.mxu0 0.0
  %1349 = vmatprep.subr.mxu0 0.0
  %1350 = vmatpush2.msra.mxu0 0.0
  %1351 = vmatprep.subr.mxu0 0.0
  %1352 = vmatpush2.msra.mxu0 0.0
  %1353 = vmatprep.subr.mxu0 0.0
  %1354 = vmatpush2.msra.mxu0 0.0
  %1355 = vmatprep.subr.mxu0 0.0
  %1356 = vmatpush2.msra.mxu0 0.0
  %1357 = vmatprep.subr.mxu0 0.0
  %1358 = vmatpush2.msra.mxu0 0.0
  %1359 = vmatprep.mubr.f32.mxu0 0.0
  %1360 = vmatmul.mubr.f32.gmra.mxu0 %v1272
  %v1361 = vpop.f32.mrf.mxu0
  %v1362 = vadd.f32 0.0, %v1361
  %v1363 = vpop.f32.mrf.mxu0
  %v1364 = vadd.f32 0.0, %v1363
  %1365 = vmatprep.mubr.f32.mxu0 0.0
  %1366 = vmatmul.mubr.f32.gmra.mxu0 %v1275
  %v1367 = vpop.f32.mrf.mxu0
  %v1368 = vadd.f32 0.0, %v1367
  %v1369 = vpop.f32.mrf.mxu0
  %v1370 = vadd.f32 0.0, %v1369
  %1371 = vmatprep.mubr.f32.mxu0 0.0
  %1372 = vmatmul.mubr.f32.gmra.mxu0 %v1278
  %v1373 = vpop.f32.mrf.mxu0
  %v1374 = vadd.f32 0.0, %v1373
  %v1375 = vpop.f32.mrf.mxu0
  %v1376 = vadd.f32 0.0, %v1375
  %1377 = vmatprep.mubr.f32.mxu0 0.0
  %1378 = vmatmul.mubr.f32.gmra.mxu0 %v1281
  %v1379 = vpop.f32.mrf.mxu0
  %v1380 = vadd.f32 0.0, %v1379
  %v1381 = vpop.f32.mrf.mxu0
  %v1382 = vadd.f32 0.0, %v1381
  %1383 = vmatprep.mubr.f32.mxu0 0.0
  %1384 = vmatmul.mubr.f32.gmra.mxu0 %v1284
  %v1385 = vpop.f32.mrf.mxu0
  %v1386 = vadd.f32 0.0, %v1385
  %v1387 = vpop.f32.mrf.mxu0
  %v1388 = vadd.f32 0.0, %v1387
  %1389 = vmatprep.mubr.f32.mxu0 0.0
  %1390 = vmatmul.mubr.f32.gmra.mxu0 %v1287
  %v1391 = vpop.f32.mrf.mxu0
  %v1392 = vadd.f32 0.0, %v1391
  %v1393 = vpop.f32.mrf.mxu0
  %v1394 = vadd.f32 0.0, %v1393
  %1395 = vmatprep.mubr.f32.mxu0 0.0
  %1396 = vmatmul.mubr.f32.gmra.mxu0 %v1290
  %v1397 = vpop.f32.mrf.mxu0
  %v1398 = vadd.f32 0.0, %v1397
  %v1399 = vpop.f32.mrf.mxu0
  %v1400 = vadd.f32 0.0, %v1399
  %1401 = vmatprep.mubr.f32.mxu0 0.0
  %1402 = vmatmul.mubr.f32.gmra.mxu0 %v1293
  %v1403 = vpop.f32.mrf.mxu0
  %v1404 = vadd.f32 0.0, %v1403
  %v1405 = vpop.f32.mrf.mxu0
  %v1406 = vadd.f32 0.0, %v1405
  %1407 = vdwg.mxu0
  %v1408 = vmul.f32 %v1362, %v446
  %v1409 = vmul.f32 %v1364, %v448
  %v1410 = vmul.f32 %v1368, %v450
  %v1411 = vmul.f32 %v1370, %v452
  %v1412 = vmul.f32 %v1374, %v456
  %v1413 = vmul.f32 %v1376, %v458
  %v1414 = vmul.f32 %v1380, %v460
  %v1415 = vmul.f32 %v1382, %v462
  %v1416 = vmul.f32 %v1386, %v466
  %v1417 = vmul.f32 %v1388, %v468
  %v1418 = vmul.f32 %v1392, %v470
  %v1419 = vmul.f32 %v1394, %v472
  %v1420 = vmul.f32 %v1398, %v476
  %v1421 = vmul.f32 %v1400, %v478
  %v1422 = vmul.f32 %v1404, %v480
  %v1423 = vmul.f32 %v1406, %v482
  %v1424 = vadd.f32 %v1408, %v1410
  %v1425 = vadd.f32 %v1424, %v1412
  %v1426 = vadd.f32 %v1425, %v1414
  %v1427 = vrot.slane %v1426, 4
  %v1428 = vadd.f32 %v1426, %v1427
  %v1429 = vrot.slane %v1428, 2
  %v1430 = vadd.f32 %v1428, %v1429
  %v1431 = vrot.slane %v1430, 1
  %v1432 = vadd.f32 %v1430, %v1431
  %v1433 = vsel %vm503, %v1409, 0.0
  %v1434 = vsel %vm503, %v1411, 0.0
  %v1435 = vadd.f32 %v1433, %v1434
  %v1436 = vsel %vm503, %v1413, 0.0
  %v1437 = vadd.f32 %v1435, %v1436
  %v1438 = vsel %vm503, %v1415, 0.0
  %v1439 = vadd.f32 %v1437, %v1438
  %v1440 = vrot.slane %v1439, 4
  %v1441 = vadd.f32 %v1439, %v1440
  %v1442 = vrot.slane %v1441, 2
  %v1443 = vadd.f32 %v1441, %v1442
  %v1444 = vrot.slane %v1443, 1
  %v1445 = vadd.f32 %v1443, %v1444
  %v1446 = vadd.f32 %v1416, %v1418
  %v1447 = vadd.f32 %v1446, %v1420
  %v1448 = vadd.f32 %v1447, %v1422
  %v1449 = vrot.slane %v1448, 4
  %v1450 = vadd.f32 %v1448, %v1449
  %v1451 = vrot.slane %v1450, 2
  %v1452 = vadd.f32 %v1450, %v1451
  %v1453 = vrot.slane %v1452, 1
  %v1454 = vadd.f32 %v1452, %v1453
  %v1455 = vsel %vm503, %v1417, 0.0
  %v1456 = vsel %vm503, %v1419, 0.0
  %v1457 = vadd.f32 %v1455, %v1456
  %v1458 = vsel %vm503, %v1421, 0.0
  %v1459 = vadd.f32 %v1457, %v1458
  %v1460 = vsel %vm503, %v1423, 0.0
  %v1461 = vadd.f32 %v1459, %v1460
  %v1462 = vrot.slane %v1461, 4
  %v1463 = vadd.f32 %v1461, %v1462
  %v1464 = vrot.slane %v1463, 2
  %v1465 = vadd.f32 %v1463, %v1464
  %v1466 = vrot.slane %v1465, 1
  %v1467 = vadd.f32 %v1465, %v1466
  %v1468 = vand.u32 2147483647, %v1432
  %v1469 = vand.u32 2147483647, %v1445
  %v1470 = vand.u32 2147483647, %v1454
  %v1471 = vand.u32 2147483647, %v1467
  %v1472 = vmul.f32 %v1432, %v1432
  %v1473 = vmul.f32 %v1445, %v1445
  %v1474 = vmul.f32 %v1454, %v1454
  %v1475 = vmul.f32 %v1467, %v1467
  %v1476 = vadd.f32 %v1472, 1.0
  %v1477 = vadd.f32 %v1473, 1.0
  %v1478 = vadd.f32 %v1474, 1.0
  %v1479 = vadd.f32 %v1475, 1.0
  %v1480 = vrcp.pop %v1476
  %v1481 = vrcp.pop %v1477
  %v1482 = vrcp.pop %v1478
  %v1483 = vrcp.pop %v1479
  %v1484 = vmul.f32 %v1468, %v1480
  %v1485 = vmul.f32 %v1469, %v1481
  %v1486 = vmul.f32 %v1470, %v1482
  %v1487 = vmul.f32 %v1471, %v1483
  %v1488 = vmul.f32 %v1484, %v1432
  %v1489 = vmul.f32 %v1485, %v1445
  %v1490 = vmul.f32 %v1486, %v1454
  %v1491 = vmul.f32 %v1487, %v1467
  %v1496 = vcombine.low %v1488, %v1489
  %v1498 = vunpack.c.l.s4 1966171168
  %v1499 = vunpack.c.0.s8 %v1498
  %v1500 = vlaneseq
  %v1501 = vshrl.u32 %v1500, 7
  %v1502 = vsub.s32 %v1499, %v1501
  %v1503 = vrot.slane %v1496, %v1502
  %v1505 = vunpack.c.l.s4 1966171168
  %v1506 = vunpack.c.0.s8 %v1505
  %v1507 = vlaneseq
  %v1508 = vshrl.u32 %v1507, 7
  %v1509 = vsub.s32 %v1506, %v1508
  %v1510 = vrot.slane %v1503, %v1509
  %v1511 = vcombine.low %v1490, %v1491
  %v1513 = vunpack.c.l.s4 1966171168
  %v1514 = vunpack.c.0.s8 %v1513
  %v1515 = vlaneseq
  %v1516 = vshrl.u32 %v1515, 7
  %v1517 = vsub.s32 %v1514, %v1516
  %v1518 = vrot.slane %v1511, %v1517
  %v1520 = vunpack.c.l.s4 1966171168
  %v1521 = vunpack.c.0.s8 %v1520
  %v1522 = vlaneseq
  %v1523 = vshrl.u32 %v1522, 7
  %v1524 = vsub.s32 %v1521, %v1523
  %v1525 = vrot.slane %v1518, %v1524
  %v1528 = vlaneseq
  %vm1529 = vcmp.ge.s32.totalorder %v1528, 0
  %vm1530 = vcmp.lt.s32.totalorder %v1528, 160
  %vm1531 = vmand %vm1529, %vm1530
  %1532 = vst.msk [vmem:[%s2] sm:$0x3] %vm1531, %v1510
  %1533 = vst.msk [vmem:[%s2 + $0x2] sm:$0x3] %vm1531, %v1525
  // Predicated region
  $region10: #{digit_capsules_forward.1} parent=0 // pred_check
    _
  $region11: #{digit_capsules_forward.1} parent=0 // pred_check_branch
    %1535 = sbr.rel (0) target = $region13
  $region12: #{digit_capsules_forward.1} parent=0 // pred_region
    _
  $region13: #{digit_capsules_forward.1} parent=0 // pred_fallthru
    _
  // Predicated region
  $region14: #{digit_capsules_forward.1} parent=0 // pred_check
    _
  $region15: #{digit_capsules_forward.1} parent=0 // pred_check_branch
    %1537 = sbr.rel (0) target = $region17
  $region16: #{digit_capsules_forward.1} parent=0 // pred_region
    _
  $region17: #{digit_capsules_forward.1} parent=0 // pred_fallthru
    _

</llo_original>
